<compile_context>
chip_gen: v6e
topology: v6e:2x2x1
jax: 0.10.0
libtpu: 0.0.40
codegen_flags: <defaults>
</compile_context>

<pallas_src>
import functools
import math

import jax
import jax.numpy as jnp
from jax.experimental import pallas as pl
from jax.experimental.pallas import tpu as pltpu

_LN_EPS = 1e-5              # torch.nn.LayerNorm default
_INV_SQRT2 = 0.7071067811865476


def _round_up(x, m):
    return (x + m - 1) // m * m


def _layer_norm_f32(x_f32, gamma_f32, beta_f32):
    mu = jnp.mean(x_f32, axis=-1, keepdims=True)
    var = jnp.mean(jnp.square(x_f32 - mu), axis=-1, keepdims=True)
    return (x_f32 - mu) * jax.lax.rsqrt(var + _LN_EPS) * gamma_f32 + beta_f32


# ---------------------------------------------------------------------------
# Attention block kernel:  out = x + Dropout(Wo @ softmax(q k^T * scale) v)
# One batch element per grid step; heads handled by a static per-head loop of
# 2-D MXU matmuls (no in-kernel reshape/transpose of the head axis needed).
# ---------------------------------------------------------------------------
def _attn_block_kernel(x_ref, g_ref, be_ref, wqkv_ref, wo_ref, bo_ref, o_ref,
                       *, heads, dim_head, scale):
    xf = x_ref[...][0].astype(jnp.float32)                     # (n, dim)
    xn = _layer_norm_f32(xf, g_ref[...].astype(jnp.float32),
                         be_ref[...].astype(jnp.float32))
    xn = xn.astype(wqkv_ref.dtype)                             # native MXU dtype

    inner = heads * dim_head
    n = xf.shape[0]
    dim = o_ref.shape[-1]
    y = jnp.zeros((n, dim), jnp.float32)

    for hd in range(heads):                                    # static unroll
        lo = hd * dim_head
        q = jnp.dot(xn, wqkv_ref[:, lo:lo + dim_head],
                    preferred_element_type=jnp.float32)
        k = jnp.dot(xn, wqkv_ref[:, inner + lo:inner + lo + dim_head],
                    preferred_element_type=jnp.float32)
        v = jnp.dot(xn, wqkv_ref[:, 2 * inner + lo:2 * inner + lo + dim_head],
                    preferred_element_type=jnp.float32)
        dots = jax.lax.dot_general(q, k, (((1,), (1,)), ((), ())),
                                   preferred_element_type=jnp.float32) * scale
        m = jnp.max(dots, axis=-1, keepdims=True)
        e = jnp.exp(dots - m)
        attn = e / jnp.sum(e, axis=-1, keepdims=True)
        ctx = jnp.dot(attn, v, preferred_element_type=jnp.float32)      # (n, dh)
        y = y + jnp.dot(ctx.astype(wo_ref.dtype),
                        wo_ref[lo:lo + dim_head, :],
                        preferred_element_type=jnp.float32)

    y = y + bo_ref[...].astype(jnp.float32) + xf               # out bias + residual
    o_ref[...] = y.astype(o_ref.dtype)[None]


def attention_block(x, g, beta, wqkv, wo, bo, *, heads, dim_head):
    b, n, dim = x.shape
    inner = heads * dim_head
    assert wqkv.shape == (dim, 3 * inner) and wo.shape == (inner, dim)

    g2 = g.reshape(1, dim)
    be2 = beta.reshape(1, dim)
    bo2 = bo.reshape(1, dim)

    itemsize = jnp.dtype(x.dtype).itemsize
    flops = b * (2 * n * dim * 3 * inner + 4 * n * n * inner + 2 * n * inner * dim)
    bytes_accessed = int((2 * x.size + wqkv.size + wo.size) * itemsize)
    cost = pl.CostEstimate(flops=flops, transcendentals=b * heads * n * n,
                           bytes_accessed=bytes_accessed)

    kernel = functools.partial(_attn_block_kernel, heads=heads,
                               dim_head=dim_head, scale=dim_head ** -0.5)
    return pl.pallas_call(
        kernel,
        out_shape=jax.ShapeDtypeStruct((b, n, dim), x.dtype),
        grid_spec=pltpu.PrefetchScalarGridSpec(
            num_scalar_prefetch=0,
            grid=(b,),
            in_specs=[
                pl.BlockSpec((1, n, dim), lambda i: (i, 0, 0)),       # x
                pl.BlockSpec((1, dim), lambda i: (0, 0)),             # LN gamma
                pl.BlockSpec((1, dim), lambda i: (0, 0)),             # LN beta
                pl.BlockSpec((dim, 3 * inner), lambda i: (0, 0)),     # Wqkv
                pl.BlockSpec((inner, dim), lambda i: (0, 0)),         # Wo
                pl.BlockSpec((1, dim), lambda i: (0, 0)),             # bo
            ],
            out_specs=pl.BlockSpec((1, n, dim), lambda i: (i, 0, 0)),
        ),
        compiler_params=pltpu.CompilerParams(
            dimension_semantics=("parallel",),
            vmem_limit_bytes=48 * 1024 * 1024),
        cost_estimate=cost,
    )(x, g2, be2, wqkv, wo, bo2)


# ---------------------------------------------------------------------------
# FeedForward block kernel:  out = x + (GELU(LN(x) @ W1 + b1) @ W2 + b2)
# grid = (row tiles, hidden chunks); f32 accumulator in VMEM scratch,
# LayerNorm computed once per row tile (k == 0), bias+residual in finalize.
# ---------------------------------------------------------------------------
def _ffn_block_kernel(x_ref, g_ref, be_ref, w1_ref, b1_ref, w2_ref, b2_ref,
                      o_ref, xn_ref, acc_ref):
    k = pl.program_id(1)

    @pl.when(k == 0)
    def _():
        xf = x_ref[...].astype(jnp.float32)
        xn = _layer_norm_f32(xf, g_ref[...].astype(jnp.float32),
                             be_ref[...].astype(jnp.float32))
        xn_ref[...] = xn.astype(xn_ref.dtype)                  # native MXU dtype
        acc_ref[...] = jnp.zeros_like(acc_ref)

    h = jnp.dot(xn_ref[...], w1_ref[...], preferred_element_type=jnp.float32)
    h = h + b1_ref[...].astype(jnp.float32)
    h = 0.5 * h * (1.0 + jax.lax.erf(h * _INV_SQRT2))          # exact GELU (torch default)
    acc_ref[...] += jnp.dot(h.astype(w2_ref.dtype), w2_ref[...],
                            preferred_element_type=jnp.float32)

    @pl.when(k == pl.num_programs(1) - 1)
    def _():
        y = acc_ref[...] + b2_ref[...].astype(jnp.float32) \
            + x_ref[...].astype(jnp.float32)                   # out bias + residual
        o_ref[...] = y.astype(o_ref.dtype)


def ffn_block(x, g, beta, w1, b1, w2, b2, *, row_tile=256, hidden_tile=512):
    b, n, dim = x.shape
    hidden = w1.shape[1]
    N = b * n
    xr = x.reshape(N, dim)

    # Large MXU-friendly row tile, clamped / padded to the actual row count.
    tm = min(row_tile, _round_up(N, 8))
    Np = _round_up(N, tm)
    if Np != N:
        xr = jnp.pad(xr, ((0, Np - N), (0, 0)))

    th = hidden_tile if hidden % hidden_tile == 0 else hidden
    th = min(th, hidden)

    g2 = g.reshape(1, dim)
    be2 = beta.reshape(1, dim)
    b1_2 = b1.reshape(1, hidden)
    b2_2 = b2.reshape(1, dim)

    itemsize = jnp.dtype(x.dtype).itemsize
    flops = 4 * Np * dim * hidden
    bytes_accessed = int((2 * Np * dim + w1.size + w2.size
                          + b1.size + b2.size + 2 * dim) * itemsize)
    cost = pl.CostEstimate(flops=flops, transcendentals=Np * hidden,
                           bytes_accessed=bytes_accessed)

    out = pl.pallas_call(
        _ffn_block_kernel,
        out_shape=jax.ShapeDtypeStruct((Np, dim), x.dtype),
        grid_spec=pltpu.PrefetchScalarGridSpec(
            num_scalar_prefetch=0,
            grid=(Np // tm, hidden // th),
            in_specs=[
                pl.BlockSpec((tm, dim), lambda i, k: (i, 0)),    # x row tile
                pl.BlockSpec((1, dim), lambda i, k: (0, 0)),     # LN gamma
                pl.BlockSpec((1, dim), lambda i, k: (0, 0)),     # LN beta
                pl.BlockSpec((dim, th), lambda i, k: (0, k)),    # W1 hidden chunk
                pl.BlockSpec((1, th), lambda i, k: (0, k)),      # b1 hidden chunk
                pl.BlockSpec((th, dim), lambda i, k: (k, 0)),    # W2 hidden chunk
                pl.BlockSpec((1, dim), lambda i, k: (0, 0)),     # b2
            ],
            out_specs=pl.BlockSpec((tm, dim), lambda i, k: (i, 0)),
            scratch_shapes=[
                pltpu.VMEM((tm, dim), w1.dtype),        # LayerNorm(x) (native dtype)
                pltpu.VMEM((tm, dim), jnp.float32),     # f32 output accumulator
            ],
        ),
        compiler_params=pltpu.CompilerParams(
            dimension_semantics=("parallel", "arbitrary"),
            vmem_limit_bytes=48 * 1024 * 1024),          # fits v7x 64 MiB VMEM
        cost_estimate=cost,
    )(xr, g2, be2, w1, b1_2, w2, b2_2)
    return out[:N].reshape(b, n, dim)


# ---------------------------------------------------------------------------
# Full Transformer forward
# ---------------------------------------------------------------------------
def transformer_pallas(x, layers, *, heads, dim_head, row_tile=256, hidden_tile=512):
    # TODO(synk): dropout is inference-mode identity (p=0.0) and mask=None only,
    # matching the PyTorch module defaults.
    for p in layers:
        x = attention_block(x, p["ln1_g"], p["ln1_b"], p["wqkv"], p["wo"], p["bo"],
                            heads=heads, dim_head=dim_head)
        x = ffn_block(x, p["ln2_g"], p["ln2_b"], p["w1"], p["b1"], p["w2"], p["b2"],
                      row_tile=row_tile, hidden_tile=hidden_tile)
    return x


# ---------------------------------------------------------------------------
# Pure-JAX reference (mirrors the PyTorch module, eval mode)
# ---------------------------------------------------------------------------
def _layer_norm_ref(x, g, b):
    mu = jnp.mean(x, axis=-1, keepdims=True)
    var = jnp.mean(jnp.square(x - mu), axis=-1, keepdims=True)
    return (x - mu) * jax.lax.rsqrt(var + _LN_EPS) * g + b


def transformer_ref(x, layers, *, heads, dim_head):
    scale = dim_head ** -0.5
    b, n, dim = x.shape
    inner = heads * dim_head
    for p in layers:
        xn = _layer_norm_ref(x, p["ln1_g"], p["ln1_b"])
        qkv = xn @ p["wqkv"]
        q, k, v = jnp.split(qkv, 3, axis=-1)

        def split_heads(t):
            return t.reshape(b, n, heads, dim_head).transpose(0, 2, 1, 3)

        q, k, v = split_heads(q), split_heads(k), split_heads(v)
        dots = jnp.einsum('bhid,bhjd->bhij', q, k) * scale
        attn = jax.nn.softmax(dots, axis=-1)
        out = jnp.einsum('bhij,bhjd->bhid', attn, v)
        out = out.transpose(0, 2, 1, 3).reshape(b, n, inner)
        x = x + out @ p["wo"] + p["bo"]

        xn = _layer_norm_ref(x, p["ln2_g"], p["ln2_b"])
        h = xn @ p["w1"] + p["b1"]
        h = 0.5 * h * (1.0 + jax.lax.erf(h * _INV_SQRT2))
        x = x + h @ p["w2"] + p["b2"]
    return x


if __name__ == "__main__":
    # Small but lane-dense shapes (dim multiple of 128 -> unmasked vector stores).
    batch, seq = 2, 8
    dim, depth, heads, dim_head, mlp_dim = 128, 2, 2, 128, 256
    inner = heads * dim_head

    key = jax.random.PRNGKey(0)
    key, kx = jax.random.split(key)
    x = jax.random.normal(kx, (batch, seq, dim), dtype=jnp.float32)

    layers = []
    for _ in range(depth):
        key, *ks = jax.random.split(key, 11)
        layers.append(dict(
            ln1_g=1.0 + 0.1 * jax.random.normal(ks[0], (dim,), jnp.float32),
            ln1_b=0.1 * jax.random.normal(ks[1], (dim,), jnp.float32),
            wqkv=jax.random.normal(ks[2], (dim, 3 * inner), jnp.float32) / math.sqrt(dim),
            wo=jax.random.normal(ks[3], (inner, dim), jnp.float32) / math.sqrt(inner),
            bo=0.02 * jax.random.normal(ks[4], (dim,), jnp.float32),
            ln2_g=1.0 + 0.1 * jax.random.normal(ks[5], (dim,), jnp.float32),
            ln2_b=0.1 * jax.random.normal(ks[6], (dim,), jnp.float32),
            w1=jax.random.normal(ks[7], (dim, mlp_dim), jnp.float32) / math.sqrt(dim),
            b1=0.02 * jax.random.normal(ks[8], (mlp_dim,), jnp.float32),
            w2=jax.random.normal(ks[9], (mlp_dim, dim), jnp.float32) / math.sqrt(mlp_dim),
            b2=jnp.zeros((dim,), jnp.float32),
        ))

    out = transformer_pallas(x, layers, heads=heads, dim_head=dim_head)
    jax.block_until_ready(out)

    ref = transformer_ref(x, layers, heads=heads, dim_head=dim_head)
    err = float(jnp.max(jnp.abs(out - ref)))
    assert out.shape == ref.shape
    assert jnp.allclose(out, ref, atol=2e-4, rtol=2e-4), f"mismatch vs reference, max_err={err}"

    print("KERNEL_OK")
</pallas_src>

<mosaic_0001>
module attributes {stable_mosaic.version = 11 : i64} {
  func.func @_attn_block_kernel(%arg0: i32, %arg1: memref<1x8x128xf32, #tpu.memory_space<vmem>>, %arg2: memref<1x128xf32, #tpu.memory_space<vmem>>, %arg3: memref<1x128xf32, #tpu.memory_space<vmem>>, %arg4: memref<128x768xf32, #tpu.memory_space<vmem>>, %arg5: memref<256x128xf32, #tpu.memory_space<vmem>>, %arg6: memref<1x128xf32, #tpu.memory_space<vmem>>, %arg7: memref<1x8x128xf32, #tpu.memory_space<vmem>>) attributes {dimension_semantics = [#tpu.dimension_semantics<parallel>], iteration_bounds = array<i64: 2>, scalar_prefetch = 0 : i64, scratch_operands = 0 : i64, tpu.core_type = #tpu.core_type<tc>, window_params = [{transform_indices = @transform_0, window_bounds = array<i64: 1, 8, 128>}, {pipeline_mode = #tpu.pipeline_mode<synchronous>, transform_indices = @transform_1, window_bounds = array<i64: 1, 128>}, {pipeline_mode = #tpu.pipeline_mode<synchronous>, transform_indices = @transform_2, window_bounds = array<i64: 1, 128>}, {pipeline_mode = #tpu.pipeline_mode<synchronous>, transform_indices = @transform_3, window_bounds = array<i64: 128, 768>}, {pipeline_mode = #tpu.pipeline_mode<synchronous>, transform_indices = @transform_4, window_bounds = array<i64: 256, 128>}, {pipeline_mode = #tpu.pipeline_mode<synchronous>, transform_indices = @transform_5, window_bounds = array<i64: 1, 128>}, {transform_indices = @transform_6, window_bounds = array<i64: 1, 8, 128>}]} {
    %c0 = arith.constant 0 : index
    %c0_0 = arith.constant 0 : index
    %c0_1 = arith.constant 0 : index
    %0 = vector.load %arg1[%c0, %c0_0, %c0_1] : memref<1x8x128xf32, #tpu.memory_space<vmem>>, vector<1x8x128xf32>
    %1 = vector.shape_cast %0 : vector<1x8x128xf32> to vector<8x128xf32>
    %c0_2 = arith.constant 0 : index
    %c0_3 = arith.constant 0 : index
    %2 = vector.load %arg2[%c0_2, %c0_3] : memref<1x128xf32, #tpu.memory_space<vmem>>, vector<1x128xf32>
    %c0_4 = arith.constant 0 : index
    %c0_5 = arith.constant 0 : index
    %3 = vector.load %arg3[%c0_4, %c0_5] : memref<1x128xf32, #tpu.memory_space<vmem>>, vector<1x128xf32>
    %cst = arith.constant dense<0.000000e+00> : vector<8xf32>
    %4 = vector.multi_reduction <add>, %1, %cst [1] : vector<8x128xf32> to vector<8xf32>
    %5 = vector.shape_cast %4 : vector<8xf32> to vector<8x1xf32>
    %cst_6 = arith.constant 1.280000e+02 : f32
    %6 = vector.broadcast %cst_6 : f32 to vector<8x1xf32>
    %7 = arith.divf %5, %6 : vector<8x1xf32>
    %8 = vector.broadcast %7 : vector<8x1xf32> to vector<8x128xf32>
    %9 = arith.subf %1, %8 : vector<8x128xf32>
    %10 = arith.mulf %9, %9 : vector<8x128xf32>
    %cst_7 = arith.constant dense<0.000000e+00> : vector<8xf32>
    %11 = vector.multi_reduction <add>, %10, %cst_7 [1] : vector<8x128xf32> to vector<8xf32>
    %12 = vector.shape_cast %11 : vector<8xf32> to vector<8x1xf32>
    %cst_8 = arith.constant 1.280000e+02 : f32
    %13 = vector.broadcast %cst_8 : f32 to vector<8x1xf32>
    %14 = arith.divf %12, %13 : vector<8x1xf32>
    %15 = vector.broadcast %7 : vector<8x1xf32> to vector<8x128xf32>
    %16 = arith.subf %1, %15 : vector<8x128xf32>
    %cst_9 = arith.constant 9.99999974E-6 : f32
    %17 = vector.broadcast %cst_9 : f32 to vector<8x1xf32>
    %18 = arith.addf %14, %17 : vector<8x1xf32>
    %19 = math.rsqrt %18 : vector<8x1xf32>
    %20 = vector.broadcast %19 : vector<8x1xf32> to vector<8x128xf32>
    %21 = arith.mulf %16, %20 : vector<8x128xf32>
    %22 = vector.broadcast %2 : vector<1x128xf32> to vector<8x128xf32>
    %23 = arith.mulf %21, %22 : vector<8x128xf32>
    %24 = vector.broadcast %3 : vector<1x128xf32> to vector<8x128xf32>
    %25 = arith.addf %23, %24 : vector<8x128xf32>
    %cst_10 = arith.constant 0.000000e+00 : f32
    %26 = vector.broadcast %cst_10 : f32 to vector<8x128xf32>
    %c0_11 = arith.constant 0 : index
    %c0_12 = arith.constant 0 : index
    %27 = vector.load %arg4[%c0_11, %c0_12] : memref<128x768xf32, #tpu.memory_space<vmem>>, vector<128x128xf32>
    %cst_13 = arith.constant dense<0.000000e+00> : vector<8x128xf32>
    %28 = tpu.matmul %25, %27, %cst_13 {dimension_numbers = #tpu.dot_dimension_numbers<[1], [0], [0], [1], [0, 0, 1, 1], [], []>} : vector<8x128xf32>, vector<128x128xf32>, vector<8x128xf32> -> vector<8x128xf32>
    %c0_14 = arith.constant 0 : index
    %c256 = arith.constant 256 : index
    %29 = vector.load %arg4[%c0_14, %c256] : memref<128x768xf32, #tpu.memory_space<vmem>>, vector<128x128xf32>
    %cst_15 = arith.constant dense<0.000000e+00> : vector<8x128xf32>
    %30 = tpu.matmul %25, %29, %cst_15 {dimension_numbers = #tpu.dot_dimension_numbers<[1], [0], [0], [1], [0, 0, 1, 1], [], []>} : vector<8x128xf32>, vector<128x128xf32>, vector<8x128xf32> -> vector<8x128xf32>
    %c0_16 = arith.constant 0 : index
    %c512 = arith.constant 512 : index
    %31 = vector.load %arg4[%c0_16, %c512] : memref<128x768xf32, #tpu.memory_space<vmem>>, vector<128x128xf32>
    %cst_17 = arith.constant dense<0.000000e+00> : vector<8x128xf32>
    %32 = tpu.matmul %25, %31, %cst_17 {dimension_numbers = #tpu.dot_dimension_numbers<[1], [0], [0], [1], [0, 0, 1, 1], [], []>} : vector<8x128xf32>, vector<128x128xf32>, vector<8x128xf32> -> vector<8x128xf32>
    %cst_18 = arith.constant dense<0.000000e+00> : vector<8x8xf32>
    %33 = tpu.matmul %28, %30, %cst_18 {dimension_numbers = #tpu.dot_dimension_numbers<[1], [1], [0], [0], [0, 0, 1, 0], [], []>} : vector<8x128xf32>, vector<8x128xf32>, vector<8x8xf32> -> vector<8x8xf32>
    %cst_19 = arith.constant 0.0883883461 : f32
    %34 = vector.broadcast %cst_19 : f32 to vector<8x8xf32>
    %35 = arith.mulf %33, %34 : vector<8x8xf32>
    %cst_20 = arith.constant dense<0xFF800000> : vector<8xf32>
    %36 = vector.multi_reduction <maximumf>, %35, %cst_20 [1] : vector<8x8xf32> to vector<8xf32>
    %37 = vector.shape_cast %36 : vector<8xf32> to vector<8x1xf32>
    %38 = vector.broadcast %37 : vector<8x1xf32> to vector<8x8xf32>
    %39 = arith.subf %35, %38 : vector<8x8xf32>
    %40 = math.exp %39 : vector<8x8xf32>
    %cst_21 = arith.constant dense<0.000000e+00> : vector<8xf32>
    %41 = vector.multi_reduction <add>, %40, %cst_21 [1] : vector<8x8xf32> to vector<8xf32>
    %42 = vector.shape_cast %41 : vector<8xf32> to vector<8x1xf32>
    %43 = vector.broadcast %42 : vector<8x1xf32> to vector<8x8xf32>
    %44 = arith.divf %40, %43 : vector<8x8xf32>
    %cst_22 = arith.constant dense<0.000000e+00> : vector<8x128xf32>
    %45 = tpu.matmul %44, %32, %cst_22 {dimension_numbers = #tpu.dot_dimension_numbers<[1], [0], [0], [1], [0, 0, 1, 1], [], []>} : vector<8x8xf32>, vector<8x128xf32>, vector<8x128xf32> -> vector<8x128xf32>
    %c0_23 = arith.constant 0 : index
    %c0_24 = arith.constant 0 : index
    %46 = vector.load %arg5[%c0_23, %c0_24] : memref<256x128xf32, #tpu.memory_space<vmem>>, vector<128x128xf32>
    %cst_25 = arith.constant dense<0.000000e+00> : vector<8x128xf32>
    %47 = tpu.matmul %45, %46, %cst_25 {dimension_numbers = #tpu.dot_dimension_numbers<[1], [0], [0], [1], [0, 0, 1, 1], [], []>} : vector<8x128xf32>, vector<128x128xf32>, vector<8x128xf32> -> vector<8x128xf32>
    %48 = arith.addf %26, %47 : vector<8x128xf32>
    %c0_26 = arith.constant 0 : index
    %c128 = arith.constant 128 : index
    %49 = vector.load %arg4[%c0_26, %c128] : memref<128x768xf32, #tpu.memory_space<vmem>>, vector<128x128xf32>
    %cst_27 = arith.constant dense<0.000000e+00> : vector<8x128xf32>
    %50 = tpu.matmul %25, %49, %cst_27 {dimension_numbers = #tpu.dot_dimension_numbers<[1], [0], [0], [1], [0, 0, 1, 1], [], []>} : vector<8x128xf32>, vector<128x128xf32>, vector<8x128xf32> -> vector<8x128xf32>
    %c0_28 = arith.constant 0 : index
    %c384 = arith.constant 384 : index
    %51 = vector.load %arg4[%c0_28, %c384] : memref<128x768xf32, #tpu.memory_space<vmem>>, vector<128x128xf32>
    %cst_29 = arith.constant dense<0.000000e+00> : vector<8x128xf32>
    %52 = tpu.matmul %25, %51, %cst_29 {dimension_numbers = #tpu.dot_dimension_numbers<[1], [0], [0], [1], [0, 0, 1, 1], [], []>} : vector<8x128xf32>, vector<128x128xf32>, vector<8x128xf32> -> vector<8x128xf32>
    %c0_30 = arith.constant 0 : index
    %c640 = arith.constant 640 : index
    %53 = vector.load %arg4[%c0_30, %c640] : memref<128x768xf32, #tpu.memory_space<vmem>>, vector<128x128xf32>
    %cst_31 = arith.constant dense<0.000000e+00> : vector<8x128xf32>
    %54 = tpu.matmul %25, %53, %cst_31 {dimension_numbers = #tpu.dot_dimension_numbers<[1], [0], [0], [1], [0, 0, 1, 1], [], []>} : vector<8x128xf32>, vector<128x128xf32>, vector<8x128xf32> -> vector<8x128xf32>
    %cst_32 = arith.constant dense<0.000000e+00> : vector<8x8xf32>
    %55 = tpu.matmul %50, %52, %cst_32 {dimension_numbers = #tpu.dot_dimension_numbers<[1], [1], [0], [0], [0, 0, 1, 0], [], []>} : vector<8x128xf32>, vector<8x128xf32>, vector<8x8xf32> -> vector<8x8xf32>
    %cst_33 = arith.constant 0.0883883461 : f32
    %56 = vector.broadcast %cst_33 : f32 to vector<8x8xf32>
    %57 = arith.mulf %55, %56 : vector<8x8xf32>
    %cst_34 = arith.constant dense<0xFF800000> : vector<8xf32>
    %58 = vector.multi_reduction <maximumf>, %57, %cst_34 [1] : vector<8x8xf32> to vector<8xf32>
    %59 = vector.shape_cast %58 : vector<8xf32> to vector<8x1xf32>
    %60 = vector.broadcast %59 : vector<8x1xf32> to vector<8x8xf32>
    %61 = arith.subf %57, %60 : vector<8x8xf32>
    %62 = math.exp %61 : vector<8x8xf32>
    %cst_35 = arith.constant dense<0.000000e+00> : vector<8xf32>
    %63 = vector.multi_reduction <add>, %62, %cst_35 [1] : vector<8x8xf32> to vector<8xf32>
    %64 = vector.shape_cast %63 : vector<8xf32> to vector<8x1xf32>
    %65 = vector.broadcast %64 : vector<8x1xf32> to vector<8x8xf32>
    %66 = arith.divf %62, %65 : vector<8x8xf32>
    %cst_36 = arith.constant dense<0.000000e+00> : vector<8x128xf32>
    %67 = tpu.matmul %66, %54, %cst_36 {dimension_numbers = #tpu.dot_dimension_numbers<[1], [0], [0], [1], [0, 0, 1, 1], [], []>} : vector<8x8xf32>, vector<8x128xf32>, vector<8x128xf32> -> vector<8x128xf32>
    %c128_37 = arith.constant 128 : index
    %c0_38 = arith.constant 0 : index
    %68 = vector.load %arg5[%c128_37, %c0_38] : memref<256x128xf32, #tpu.memory_space<vmem>>, vector<128x128xf32>
    %cst_39 = arith.constant dense<0.000000e+00> : vector<8x128xf32>
    %69 = tpu.matmul %67, %68, %cst_39 {dimension_numbers = #tpu.dot_dimension_numbers<[1], [0], [0], [1], [0, 0, 1, 1], [], []>} : vector<8x128xf32>, vector<128x128xf32>, vector<8x128xf32> -> vector<8x128xf32>
    %70 = arith.addf %48, %69 : vector<8x128xf32>
    %c0_40 = arith.constant 0 : index
    %c0_41 = arith.constant 0 : index
    %71 = vector.load %arg6[%c0_40, %c0_41] : memref<1x128xf32, #tpu.memory_space<vmem>>, vector<1x128xf32>
    %72 = vector.broadcast %71 : vector<1x128xf32> to vector<8x128xf32>
    %73 = arith.addf %70, %72 : vector<8x128xf32>
    %74 = arith.addf %73, %1 : vector<8x128xf32>
    %75 = vector.shape_cast %74 : vector<8x128xf32> to vector<1x8x128xf32>
    %c0_42 = arith.constant 0 : index
    %c0_43 = arith.constant 0 : index
    %c0_44 = arith.constant 0 : index
    %76 = vector.load %arg7[%c0_42, %c0_43, %c0_44] : memref<1x8x128xf32, #tpu.memory_space<vmem>>, vector<1x8x128xf32>
    tpu.vector_store %arg7[%c0_42, %c0_43, %c0_44], %75 {strides = array<i32>} : memref<1x8x128xf32, #tpu.memory_space<vmem>>, vector<1x8x128xf32>,
    return
  }
  func.func @transform_0(%arg0: i32) -> (i32, i32, i32) {
    %c0_i32 = arith.constant 0 : i32
    %c0_i32_0 = arith.constant 0 : i32
    %c0_i32_1 = arith.constant 0 : i32
    return %arg0, %c0_i32, %c0_i32_0 : i32, i32, i32
  }
  func.func @transform_1(%arg0: i32) -> (i32, i32) {
    %c0_i32 = arith.constant 0 : i32
    %c0_i32_0 = arith.constant 0 : i32
    %c0_i32_1 = arith.constant 0 : i32
    return %c0_i32, %c0_i32_0 : i32, i32
  }
  func.func @transform_2(%arg0: i32) -> (i32, i32) {
    %c0_i32 = arith.constant 0 : i32
    %c0_i32_0 = arith.constant 0 : i32
    %c0_i32_1 = arith.constant 0 : i32
    return %c0_i32, %c0_i32_0 : i32, i32
  }
  func.func @transform_3(%arg0: i32) -> (i32, i32) {
    %c0_i32 = arith.constant 0 : i32
    %c0_i32_0 = arith.constant 0 : i32
    %c0_i32_1 = arith.constant 0 : i32
    return %c0_i32, %c0_i32_0 : i32, i32
  }
  func.func @transform_4(%arg0: i32) -> (i32, i32) {
    %c0_i32 = arith.constant 0 : i32
    %c0_i32_0 = arith.constant 0 : i32
    %c0_i32_1 = arith.constant 0 : i32
    return %c0_i32, %c0_i32_0 : i32, i32
  }
  func.func @transform_5(%arg0: i32) -> (i32, i32) {
    %c0_i32 = arith.constant 0 : i32
    %c0_i32_0 = arith.constant 0 : i32
    %c0_i32_1 = arith.constant 0 : i32
    return %c0_i32, %c0_i32_0 : i32, i32
  }
  func.func @transform_6(%arg0: i32) -> (i32, i32, i32) {
    %c0_i32 = arith.constant 0 : i32
    %c0_i32_0 = arith.constant 0 : i32
    %c0_i32_1 = arith.constant 0 : i32
    return %arg0, %c0_i32, %c0_i32_0 : i32, i32, i32
  }
}

</mosaic_0001>

<llo_original>
// kernel: tpu_custom_call.1
$region0: #{tpu_custom_call.1}
  #allocation0 [shape = 'u32[]', space=smem, size = 0x4, offset = 0x4, fixed_abs, tag = 'smem constant byte address 0x4 - core index']
  #allocation1 [shape = 'u32[144,128]{1,0:T(1,128)}', space=vmem, size = 0x12000, scoped, tag = 'internal scratch']
  %s0 = inlined_call_operand.hbm [shape: f32[2,8,128], index: 0, kind: input, shape index: {}]
  %s1 = inlined_call_operand.vmem [shape: f32[1,128], index: 1, kind: input, shape index: {}]
  %s2 = inlined_call_operand.vmem [shape: f32[1,128], index: 2, kind: input, shape index: {}]
  %s3 = inlined_call_operand.hbm [shape: f32[128,768], index: 3, kind: input, shape index: {}]
  %s4 = inlined_call_operand.hbm [shape: f32[256,128], index: 4, kind: input, shape index: {}]
  %s5 = inlined_call_operand.vmem [shape: f32[1,128], index: 5, kind: input, shape index: {}]
  %s6 = inlined_call_operand.hbm [shape: f32[2,8,128], index: 6, kind: output, shape index: {}]
  %s7 = sld [smem:[#allocation0]]
  $region69: #{tpu_custom_call.1} parent=0
    _
  %s9 = ssub.s32 1, %s7
  %s10 = scalar_select 0, %s9, %s7
  $region1: #{tpu_custom_call.1} parent=0
    #allocation2 [shape = 'u8[8192]{0}', space=vmem, size = 0x2000, scoped, tag = 'input window, operand 0']
    #allocation3 [shape = 's32[2]{0}', space=sflag, size = 0x8, scoped, tag = 'scoped memory for tpu_custom_call.1']
    #allocation4 [shape = 's32[2]{0}', space=sflag, size = 0x8, scoped, tag = 'scoped memory for tpu_custom_call.1']
    #allocation5 [shape = 'u8[393216]{0}', space=vmem, size = 0x60000, scoped, tag = 'input window, operand 3, single buffered']
    #allocation6 [shape = 's32[1]{0}', space=sflag, size = 0x4, scoped, tag = 'scoped memory for tpu_custom_call.1']
    #allocation7 [shape = 'u8[131072]{0}', space=vmem, size = 0x20000, scoped, tag = 'input window, operand 4, single buffered']
    #allocation8 [shape = 'u8[8192]{0}', space=vmem, size = 0x2000, scoped, tag = 'output window, operand 0']
    %11 = vsyncpa [#allocation3], 0
    %s12 = scalar_lea.sflag [#allocation3], 1
    %13 = vsyncpa %s12, 0
    %14 = vsyncpa [#allocation6], 0
    %15 = vsyncpa [#allocation4], 0
    %s16 = scalar_lea.sflag [#allocation4], 1
    %17 = vsyncpa %s16, 0
    loop: start=0, step=1, limit=4
    $region2: #{tpu_custom_call.1} parent=1 // loop_pre_header
      _
    $region3: #{tpu_custom_call.1} parent=1 // loop_header
      %s19 = sphi 0, %s23
      %p20 = scmp.ge.s32.totalorder %s19, 4
      %s29 = sphi 0, %s31
      %s32 = sphi 0, %s29
      %s33 = sphi 0, %s32
      %s49 = sphi 0, %s33
      %s53 = sphi 0, %s53
      %s55 = sphi 0, %s53
      %s56 = sphi 0, %s55
      %s70 = sphi 0, %s56
      %s74 = sphi 0, %s74
      %s76 = sphi 0, %s74
      %s77 = sphi 0, %s76
      %s91 = sphi 0, %s77
      %s95 = sphi 0, %s95
      %s97 = sphi 0, %s95
      %s98 = sphi 0, %s97
      %s112 = sphi 0, %s98
      %s116 = sphi 0, %s116
      %s118 = sphi 0, %s116
      %s119 = sphi 0, %s118
      %s133 = sphi 0, %s119
      %s137 = sphi 0, %s137
      %s139 = sphi 0, %s137
      %s140 = sphi 0, %s139
      %s154 = sphi 0, %s140
      %s160 = sphi 0, %s162
      %s163 = sphi 0, %s160
      %s164 = sphi 0, %s163
      %s180 = sphi 0, %s164
    $region4: #{tpu_custom_call.1} parent=1 // loop_header_branch
      %22 = sbr.rel (%p20) target = $region8
    $region5: #{tpu_custom_call.1} parent=1 // loop_body
      %s24 = ssub.s32 %s19, 1
      %s25 = ssub.s32 %s19, 2
      %s26 = sadd.s32 %s19, 1
      %s27 = ssub.s32 %s19, %s26
      %p28 = scmp.eq.s32.totalorder %s27, 0
      %s30 = sadd.s32 %s29, 1
      %s31 = scalar_select %p28, %s29, %s30
      %p34 = pneg %p28
      %p35 = scmp.eq.s32.totalorder %s19, 1
      %p36 = por %p34, %p35
      %p37 = scmp.ne.s32.totalorder %s29, %s32
      %p38 = scmp.eq.s32.totalorder %s19, 0
      %p39 = por %p37, %p38
      %p40 = scmp.ne.s32.totalorder %s29, %s32
      %p41 = scmp.eq.s32.totalorder %s24, 1
      %p42 = por %p40, %p41
      %p43 = scmp.ne.s32.totalorder %s32, %s33
      %p44 = scmp.eq.s32.totalorder %s24, 0
      %p45 = por %p43, %p44
      %p46 = scmp.ne.s32.totalorder %s32, %s33
      %p47 = scmp.eq.s32.totalorder %s25, 1
      %p48 = por %p46, %p47
      %p50 = scmp.ne.s32.totalorder %s33, %s49
      %p51 = scmp.eq.s32.totalorder %s25, 0
      %p52 = por %p50, %p51
      %s54 = sadd.s32 %s53, 1
      %p57 = scmp.eq.s32.totalorder %s19, 1
      %p58 = scmp.ne.s32.totalorder %s53, %s55
      %p59 = scmp.eq.s32.totalorder %s19, 0
      %p60 = por %p58, %p59
      %p61 = scmp.ne.s32.totalorder %s53, %s55
      %p62 = scmp.eq.s32.totalorder %s24, 1
      %p63 = por %p61, %p62
      %p64 = scmp.ne.s32.totalorder %s55, %s56
      %p65 = scmp.eq.s32.totalorder %s24, 0
      %p66 = por %p64, %p65
      %p67 = scmp.ne.s32.totalorder %s55, %s56
      %p68 = scmp.eq.s32.totalorder %s25, 1
      %p69 = por %p67, %p68
      %p71 = scmp.ne.s32.totalorder %s56, %s70
      %p72 = scmp.eq.s32.totalorder %s25, 0
      %p73 = por %p71, %p72
      %s75 = sadd.s32 %s74, 1
      %p78 = scmp.eq.s32.totalorder %s19, 1
      %p79 = scmp.ne.s32.totalorder %s74, %s76
      %p80 = scmp.eq.s32.totalorder %s19, 0
      %p81 = por %p79, %p80
      %p82 = scmp.ne.s32.totalorder %s74, %s76
      %p83 = scmp.eq.s32.totalorder %s24, 1
      %p84 = por %p82, %p83
      %p85 = scmp.ne.s32.totalorder %s76, %s77
      %p86 = scmp.eq.s32.totalorder %s24, 0
      %p87 = por %p85, %p86
      %p88 = scmp.ne.s32.totalorder %s76, %s77
      %p89 = scmp.eq.s32.totalorder %s25, 1
      %p90 = por %p88, %p89
      %p92 = scmp.ne.s32.totalorder %s77, %s91
      %p93 = scmp.eq.s32.totalorder %s25, 0
      %p94 = por %p92, %p93
      %s96 = sadd.s32 %s95, 1
      %p99 = scmp.eq.s32.totalorder %s19, 1
      %p100 = scmp.ne.s32.totalorder %s95, %s97
      %p101 = scmp.eq.s32.totalorder %s19, 0
      %p102 = por %p100, %p101
      %p103 = scmp.ne.s32.totalorder %s95, %s97
      %p104 = scmp.eq.s32.totalorder %s24, 1
      %p105 = por %p103, %p104
      %p106 = scmp.ne.s32.totalorder %s97, %s98
      %p107 = scmp.eq.s32.totalorder %s24, 0
      %p108 = por %p106, %p107
      %p109 = scmp.ne.s32.totalorder %s97, %s98
      %p110 = scmp.eq.s32.totalorder %s25, 1
      %p111 = por %p109, %p110
      %p113 = scmp.ne.s32.totalorder %s98, %s112
      %p114 = scmp.eq.s32.totalorder %s25, 0
      %p115 = por %p113, %p114
      %s117 = sadd.s32 %s116, 1
      %p120 = scmp.eq.s32.totalorder %s19, 1
      %p121 = scmp.ne.s32.totalorder %s116, %s118
      %p122 = scmp.eq.s32.totalorder %s19, 0
      %p123 = por %p121, %p122
      %p124 = scmp.ne.s32.totalorder %s116, %s118
      %p125 = scmp.eq.s32.totalorder %s24, 1
      %p126 = por %p124, %p125
      %p127 = scmp.ne.s32.totalorder %s118, %s119
      %p128 = scmp.eq.s32.totalorder %s24, 0
      %p129 = por %p127, %p128
      %p130 = scmp.ne.s32.totalorder %s118, %s119
      %p131 = scmp.eq.s32.totalorder %s25, 1
      %p132 = por %p130, %p131
      %p134 = scmp.ne.s32.totalorder %s119, %s133
      %p135 = scmp.eq.s32.totalorder %s25, 0
      %p136 = por %p134, %p135
      %s138 = sadd.s32 %s137, 1
      %p141 = scmp.eq.s32.totalorder %s19, 1
      %p142 = scmp.ne.s32.totalorder %s137, %s139
      %p143 = scmp.eq.s32.totalorder %s19, 0
      %p144 = por %p142, %p143
      %p145 = scmp.ne.s32.totalorder %s137, %s139
      %p146 = scmp.eq.s32.totalorder %s24, 1
      %p147 = por %p145, %p146
      %p148 = scmp.ne.s32.totalorder %s139, %s140
      %p149 = scmp.eq.s32.totalorder %s24, 0
      %p150 = por %p148, %p149
      %p151 = scmp.ne.s32.totalorder %s139, %s140
      %p152 = scmp.eq.s32.totalorder %s25, 1
      %p153 = por %p151, %p152
      %p155 = scmp.ne.s32.totalorder %s140, %s154
      %p156 = scmp.eq.s32.totalorder %s25, 0
      %p157 = por %p155, %p156
      %s158 = ssub.s32 %s19, %s26
      %p159 = scmp.eq.s32.totalorder %s158, 0
      %s161 = sadd.s32 %s160, 1
      %s162 = scalar_select %p159, %s160, %s161
      %p165 = pneg %p159
      %p166 = scmp.eq.s32.totalorder %s19, 1
      %p167 = por %p165, %p166
      %p168 = scmp.ne.s32.totalorder %s160, %s163
      %p169 = scmp.eq.s32.totalorder %s19, 0
      %p170 = por %p168, %p169
      %p171 = scmp.ne.s32.totalorder %s160, %s163
      %p172 = scmp.eq.s32.totalorder %s24, 1
      %p173 = por %p171, %p172
      %p174 = scmp.ne.s32.totalorder %s163, %s164
      %p175 = scmp.eq.s32.totalorder %s24, 0
      %p176 = por %p174, %p175
      %p177 = scmp.ne.s32.totalorder %s163, %s164
      %p178 = scmp.eq.s32.totalorder %s25, 1
      %p179 = por %p177, %p178
      %p181 = scmp.ne.s32.totalorder %s164, %s180
      %p182 = scmp.eq.s32.totalorder %s25, 0
      %p183 = por %p181, %p182
      %p184 = scmp.le.s32.totalorder 1, %s19
      %p185 = scmp.lt.s32.totalorder %s19, 3
      %p186 = pnand %p184, %p185
      %p187 = pneg %p186
      // Predicated region
      $region9: #{tpu_custom_call.1} parent=5 // pred_check
        _
      $region10: #{tpu_custom_call.1} parent=5 // pred_check_branch
        %189 = sbr.rel (%p186) target = $region12
      $region11: #{tpu_custom_call.1} parent=5 // pred_region
        %s190 = ssub.s32 %s19, 1
        // Predicated region
        $region13: #{tpu_custom_call.1} parent=11 // pred_check
          %p191 = pneg %p66
        $region14: #{tpu_custom_call.1} parent=11 // pred_check_branch
          %193 = sbr.rel (%p191) target = $region16
        $region15: #{tpu_custom_call.1} parent=11 // pred_region
          _
        $region16: #{tpu_custom_call.1} parent=11 // pred_fallthru
          _
        // Predicated region
        $region17: #{tpu_custom_call.1} parent=11 // pred_check
          %p194 = pneg %p87
        $region18: #{tpu_custom_call.1} parent=11 // pred_check_branch
          %196 = sbr.rel (%p194) target = $region20
        $region19: #{tpu_custom_call.1} parent=11 // pred_region
          _
        $region20: #{tpu_custom_call.1} parent=11 // pred_fallthru
          _
        // Predicated region
        $region21: #{tpu_custom_call.1} parent=11 // pred_check
          %p197 = pneg %p108
        $region22: #{tpu_custom_call.1} parent=11 // pred_check_branch
          %199 = sbr.rel (%p197) target = $region24
        $region23: #{tpu_custom_call.1} parent=11 // pred_region
          %s201 = ssub.s32 12288, 12288
          %202 = vsyncadd [#allocation6], %s201
          %s203 = sshll.u32 [#allocation5], 4
          %s204 = int_to_ptr.vmem [resolvable:$true] %s203
          %209 = dma.hbm_to_vmem [thread:$0]  %s3, 12288, %s204, [#allocation6], 768, 768, 48
        $region24: #{tpu_custom_call.1} parent=11 // pred_fallthru
          _
        // Predicated region
        $region25: #{tpu_custom_call.1} parent=11 // pred_check
          %p210 = pneg %p129
        $region26: #{tpu_custom_call.1} parent=11 // pred_check_branch
          %212 = sbr.rel (%p210) target = $region28
        $region27: #{tpu_custom_call.1} parent=11 // pred_region
          %s214 = ssub.s32 4096, 4096
          %215 = vsyncadd [#allocation6], %s214
          %s216 = sshll.u32 [#allocation7], 4
          %s217 = int_to_ptr.vmem [resolvable:$true] %s216
          %222 = dma.hbm_to_vmem [thread:$0]  %s4, 4096, %s217, [#allocation6], 128, 128, 8
        $region28: #{tpu_custom_call.1} parent=11 // pred_fallthru
          _
        // Predicated region
        $region29: #{tpu_custom_call.1} parent=11 // pred_check
          %p223 = pneg %p150
        $region30: #{tpu_custom_call.1} parent=11 // pred_check_branch
          %225 = sbr.rel (%p223) target = $region32
        $region31: #{tpu_custom_call.1} parent=11 // pred_region
          _
        $region32: #{tpu_custom_call.1} parent=11 // pred_fallthru
          _
      $region12: #{tpu_custom_call.1} parent=5 // pred_fallthru
        _
      %p226 = scmp.lt.s32.totalorder %s19, 2
      // Predicated region
      $region33: #{tpu_custom_call.1} parent=5 // pred_check
        %p227 = pneg %p226
      $region34: #{tpu_custom_call.1} parent=5 // pred_check_branch
        %229 = sbr.rel (%p227) target = $region36
      $region35: #{tpu_custom_call.1} parent=5 // pred_region
        // Predicated region
        $region37: #{tpu_custom_call.1} parent=35 // pred_check
          %p230 = pneg %p39
        $region38: #{tpu_custom_call.1} parent=35 // pred_check_branch
          %232 = sbr.rel (%p230) target = $region40
        $region39: #{tpu_custom_call.1} parent=35 // pred_region
          %s233 = sand.u32 %s29, 1
          %s234 = scalar_lea.sflag [#allocation3], %s233
          %s235 = sand.u32 %s29, 1
          %s236 = smul.addr %s235, 8
          %s237 = scalar_lea.vmem [#allocation2], %s236
          %s239 = ssub.s32 128, 128
          %240 = vsyncadd %s234, %s239
          %s241 = smul.addr %s19, 128
          %s242 = scalar_lea.hbm %s0, %s241
          %s244 = sshll.u32 %s237, 4
          %s245 = int_to_ptr.vmem [resolvable:$true] %s244
          %247 = dma.hbm_to_vmem [thread:$0]  %s242, 128, %s245, %s234
        $region40: #{tpu_custom_call.1} parent=35 // pred_fallthru
          _
      $region36: #{tpu_custom_call.1} parent=5 // pred_fallthru
        _
      %p248 = scmp.le.s32.totalorder 1, %s19
      %p249 = scmp.lt.s32.totalorder %s19, 3
      %p250 = pnand %p248, %p249
      %p251 = pneg %p250
      // Predicated region
      $region41: #{tpu_custom_call.1} parent=5 // pred_check
        _
      $region42: #{tpu_custom_call.1} parent=5 // pred_check_branch
        %253 = sbr.rel (%p250) target = $region44
      $region43: #{tpu_custom_call.1} parent=5 // pred_region
        %s254 = ssub.s32 %s19, 1
        %s255 = sand.u32 %s32, 1
        %s256 = scalar_lea.sflag [#allocation3], %s255
        %s257 = sand.u32 %s32, 1
        %s258 = smul.addr %s257, 8
        %s259 = scalar_lea.vmem [#allocation2], %s258
        // Predicated region
        $region45: #{tpu_custom_call.1} parent=43 // pred_check
          %p260 = pneg %p45
        $region46: #{tpu_custom_call.1} parent=43 // pred_check_branch
          %262 = sbr.rel (%p260) target = $region48
        $region47: #{tpu_custom_call.1} parent=43 // pred_region
          %263 = dma.done %s256, 128
        $region48: #{tpu_custom_call.1} parent=43 // pred_fallthru
          _
        // Predicated region
        $region49: #{tpu_custom_call.1} parent=43 // pred_check
          %p264 = pneg %p108
        $region50: #{tpu_custom_call.1} parent=43 // pred_check_branch
          %266 = sbr.rel (%p264) target = $region52
        $region51: #{tpu_custom_call.1} parent=43 // pred_region
          %267 = dma.done [#allocation6], 12288
        $region52: #{tpu_custom_call.1} parent=43 // pred_fallthru
          _
        // Predicated region
        $region53: #{tpu_custom_call.1} parent=43 // pred_check
          %p268 = pneg %p129
        $region54: #{tpu_custom_call.1} parent=43 // pred_check_branch
          %270 = sbr.rel (%p268) target = $region56
        $region55: #{tpu_custom_call.1} parent=43 // pred_region
          %271 = dma.done [#allocation6], 4096
        $region56: #{tpu_custom_call.1} parent=43 // pred_fallthru
          _
        %s272 = sand.u32 %s32, 1
        %s273 = scalar_lea.sflag [#allocation3], %s272
        %s274 = sand.u32 %s32, 1
        %s275 = smul.addr %s274, 8
        %s276 = scalar_lea.vmem [#allocation2], %s275
        %p277 = pneg %p45
        %p278 = pneg %p42
        %p279 = pneg %p66
        %p280 = pneg %p63
        %p281 = pneg %p87
        %p282 = pneg %p84
        %p283 = pneg %p108
        %p284 = pneg %p105
        %p285 = pneg %p129
        %p286 = pneg %p126
        %p287 = pneg %p150
        %p288 = pneg %p147
        %p289 = pneg %p176
        %p290 = pneg %p173
        %s291 = sand.u32 %s163, 1
        %s292 = scalar_lea.sflag [#allocation4], %s291
        %s293 = sand.u32 %s163, 1
        %s294 = smul.addr %s293, 8
        %s295 = scalar_lea.vmem [#allocation8], %s294
        %v296 = vld [vmem:[%s259] sm:$0xff]
        %v297 = vld [vmem:[%s1] sm:$0x1]
        %v298 = vld [vmem:[%s2] sm:$0x1]
        %299 = vadd.xlane.f32.xlu0 %v296
        %v300 = vpop.xlane.xlu0 %299
        %v301 = vrcp.pop 128.0
        %v302 = vmul.f32 %v300, %v301
        %v303 = vsub.f32 %v296, %v302
        %v304 = vmul.f32 %v303, %v303
        %305 = vadd.xlane.f32.xlu0 %v304
        %v306 = vpop.xlane.xlu0 %305
        %v307 = vmul.f32 %v306, %v301
        %v308 = vadd.f32 %v307, 1e-05
        %v309 = vrsqrt.pop %v308
        %v310 = vmul.f32 %v303, %v309
        %v312 = vlaneseq
        %v313 = vshrl.u32 %v312, 7
        %v314 = vsub.s32 0, %v313
        %v315 = vrot.slane %v297, %v314
        %v317 = vmul.f32 %v310, %v315
        %v319 = vlaneseq
        %v320 = vshrl.u32 %v319, 7
        %v321 = vsub.s32 0, %v320
        %v322 = vrot.slane %v298, %v321
        %v324 = vadd.f32 %v317, %v322
        %v325 = vld [vmem:[#allocation5] sm:$0xff]
        %v326 = vld [vmem:[#allocation5 + $0x30] sm:$0xff]
        %v327 = vld [vmem:[#allocation5 + $0x60] sm:$0xff]
        %v328 = vld [vmem:[#allocation5 + $0x90] sm:$0xff]
        %v329 = vld [vmem:[#allocation5 + $0xc0] sm:$0xff]
        %v330 = vld [vmem:[#allocation5 + $0xf0] sm:$0xff]
        %v331 = vld [vmem:[#allocation5 + $0x120] sm:$0xff]
        %v332 = vld [vmem:[#allocation5 + $0x150] sm:$0xff]
        %v333 = vld [vmem:[#allocation5 + $0x180] sm:$0xff]
        %v334 = vld [vmem:[#allocation5 + $0x1b0] sm:$0xff]
        %v335 = vld [vmem:[#allocation5 + $0x1e0] sm:$0xff]
        %v336 = vld [vmem:[#allocation5 + $0x210] sm:$0xff]
        %v337 = vld [vmem:[#allocation5 + $0x240] sm:$0xff]
        %v338 = vld [vmem:[#allocation5 + $0x270] sm:$0xff]
        %v339 = vld [vmem:[#allocation5 + $0x2a0] sm:$0xff]
        %v340 = vld [vmem:[#allocation5 + $0x2d0] sm:$0xff]
        %341 = vmatprep.subr.mxu0 0.0
        %342 = vmatpush1.msra.mxu0 %v340
        %343 = vmatprep.subr.mxu0 0.0
        %344 = vmatpush1.msra.mxu0 %v339
        %345 = vmatprep.subr.mxu0 0.0
        %346 = vmatpush1.msra.mxu0 %v338
        %347 = vmatprep.subr.mxu0 0.0
        %348 = vmatpush1.msra.mxu0 %v337
        %349 = vmatprep.subr.mxu0 0.0
        %350 = vmatpush1.msra.mxu0 %v336
        %351 = vmatprep.subr.mxu0 0.0
        %352 = vmatpush1.msra.mxu0 %v335
        %353 = vmatprep.subr.mxu0 0.0
        %354 = vmatpush1.msra.mxu0 %v334
        %355 = vmatprep.subr.mxu0 0.0
        %356 = vmatpush1.msra.mxu0 %v333
        %357 = vmatprep.subr.mxu0 0.0
        %358 = vmatpush1.msra.mxu0 %v332
        %359 = vmatprep.subr.mxu0 0.0
        %360 = vmatpush1.msra.mxu0 %v331
        %361 = vmatprep.subr.mxu0 0.0
        %362 = vmatpush1.msra.mxu0 %v330
        %363 = vmatprep.subr.mxu0 0.0
        %364 = vmatpush1.msra.mxu0 %v329
        %365 = vmatprep.subr.mxu0 0.0
        %366 = vmatpush1.msra.mxu0 %v328
        %367 = vmatprep.subr.mxu0 0.0
        %368 = vmatpush1.msra.mxu0 %v327
        %369 = vmatprep.subr.mxu0 0.0
        %370 = vmatpush1.msra.mxu0 %v326
        %371 = vmatprep.subr.mxu0 0.0
        %372 = vmatpush1.msra.mxu0 %v325
        %373 = vmatprep.subr.mxu0 0.0
        %374 = vmatpush2.msra.mxu0 0.0
        %375 = vmatprep.subr.mxu0 0.0
        %376 = vmatpush2.msra.mxu0 0.0
        %377 = vmatprep.subr.mxu0 0.0
        %378 = vmatpush2.msra.mxu0 0.0
        %379 = vmatprep.subr.mxu0 0.0
        %380 = vmatpush2.msra.mxu0 0.0
        %381 = vmatprep.subr.mxu0 0.0
        %382 = vmatpush2.msra.mxu0 0.0
        %383 = vmatprep.subr.mxu0 0.0
        %384 = vmatpush2.msra.mxu0 0.0
        %385 = vmatprep.subr.mxu0 0.0
        %386 = vmatpush2.msra.mxu0 0.0
        %387 = vmatprep.subr.mxu0 0.0
        %388 = vmatpush2.msra.mxu0 0.0
        %389 = vmatprep.subr.mxu0 0.0
        %390 = vmatpush2.msra.mxu0 0.0
        %391 = vmatprep.subr.mxu0 0.0
        %392 = vmatpush2.msra.mxu0 0.0
        %393 = vmatprep.subr.mxu0 0.0
        %394 = vmatpush2.msra.mxu0 0.0
        %395 = vmatprep.subr.mxu0 0.0
        %396 = vmatpush2.msra.mxu0 0.0
        %397 = vmatprep.subr.mxu0 0.0
        %398 = vmatpush2.msra.mxu0 0.0
        %399 = vmatprep.subr.mxu0 0.0
        %400 = vmatpush2.msra.mxu0 0.0
        %401 = vmatprep.subr.mxu0 0.0
        %402 = vmatpush2.msra.mxu0 0.0
        %403 = vmatprep.subr.mxu0 0.0
        %404 = vmatpush2.msra.mxu0 0.0
        %405 = vmatprep.mubr.f32.mxu0 0.0
        %406 = vmatmul.mubr.f32.gmra.mxu0 %v324
        %v407 = vpop.f32.mrf.mxu0
        %v408 = vadd.f32 0.0, %v407
        %v409 = vpop.f32.mrf.mxu0
        %410 = vdwg.mxu0
        %v411 = vld [vmem:[#allocation5 + $0x10] sm:$0xff]
        %v412 = vld [vmem:[#allocation5 + $0x40] sm:$0xff]
        %v413 = vld [vmem:[#allocation5 + $0x70] sm:$0xff]
        %v414 = vld [vmem:[#allocation5 + $0xa0] sm:$0xff]
        %v415 = vld [vmem:[#allocation5 + $0xd0] sm:$0xff]
        %v416 = vld [vmem:[#allocation5 + $0x100] sm:$0xff]
        %v417 = vld [vmem:[#allocation5 + $0x130] sm:$0xff]
        %v418 = vld [vmem:[#allocation5 + $0x160] sm:$0xff]
        %v419 = vld [vmem:[#allocation5 + $0x190] sm:$0xff]
        %v420 = vld [vmem:[#allocation5 + $0x1c0] sm:$0xff]
        %v421 = vld [vmem:[#allocation5 + $0x1f0] sm:$0xff]
        %v422 = vld [vmem:[#allocation5 + $0x220] sm:$0xff]
        %v423 = vld [vmem:[#allocation5 + $0x250] sm:$0xff]
        %v424 = vld [vmem:[#allocation5 + $0x280] sm:$0xff]
        %v425 = vld [vmem:[#allocation5 + $0x2b0] sm:$0xff]
        %v426 = vld [vmem:[#allocation5 + $0x2e0] sm:$0xff]
        %427 = vmatprep.subr.mxu0 0.0
        %428 = vmatpush1.msra.mxu0 %v426
        %429 = vmatprep.subr.mxu0 0.0
        %430 = vmatpush1.msra.mxu0 %v425
        %431 = vmatprep.subr.mxu0 0.0
        %432 = vmatpush1.msra.mxu0 %v424
        %433 = vmatprep.subr.mxu0 0.0
        %434 = vmatpush1.msra.mxu0 %v423
        %435 = vmatprep.subr.mxu0 0.0
        %436 = vmatpush1.msra.mxu0 %v422
        %437 = vmatprep.subr.mxu0 0.0
        %438 = vmatpush1.msra.mxu0 %v421
        %439 = vmatprep.subr.mxu0 0.0
        %440 = vmatpush1.msra.mxu0 %v420
        %441 = vmatprep.subr.mxu0 0.0
        %442 = vmatpush1.msra.mxu0 %v419
        %443 = vmatprep.subr.mxu0 0.0
        %444 = vmatpush1.msra.mxu0 %v418
        %445 = vmatprep.subr.mxu0 0.0
        %446 = vmatpush1.msra.mxu0 %v417
        %447 = vmatprep.subr.mxu0 0.0
        %448 = vmatpush1.msra.mxu0 %v416
        %449 = vmatprep.subr.mxu0 0.0
        %450 = vmatpush1.msra.mxu0 %v415
        %451 = vmatprep.subr.mxu0 0.0
        %452 = vmatpush1.msra.mxu0 %v414
        %453 = vmatprep.subr.mxu0 0.0
        %454 = vmatpush1.msra.mxu0 %v413
        %455 = vmatprep.subr.mxu0 0.0
        %456 = vmatpush1.msra.mxu0 %v412
        %457 = vmatprep.subr.mxu0 0.0
        %458 = vmatpush1.msra.mxu0 %v411
        %459 = vmatprep.subr.mxu0 0.0
        %460 = vmatpush2.msra.mxu0 0.0
        %461 = vmatprep.subr.mxu0 0.0
        %462 = vmatpush2.msra.mxu0 0.0
        %463 = vmatprep.subr.mxu0 0.0
        %464 = vmatpush2.msra.mxu0 0.0
        %465 = vmatprep.subr.mxu0 0.0
        %466 = vmatpush2.msra.mxu0 0.0
        %467 = vmatprep.subr.mxu0 0.0
        %468 = vmatpush2.msra.mxu0 0.0
        %469 = vmatprep.subr.mxu0 0.0
        %470 = vmatpush2.msra.mxu0 0.0
        %471 = vmatprep.subr.mxu0 0.0
        %472 = vmatpush2.msra.mxu0 0.0
        %473 = vmatprep.subr.mxu0 0.0
        %474 = vmatpush2.msra.mxu0 0.0
        %475 = vmatprep.subr.mxu0 0.0
        %476 = vmatpush2.msra.mxu0 0.0
        %477 = vmatprep.subr.mxu0 0.0
        %478 = vmatpush2.msra.mxu0 0.0
        %479 = vmatprep.subr.mxu0 0.0
        %480 = vmatpush2.msra.mxu0 0.0
        %481 = vmatprep.subr.mxu0 0.0
        %482 = vmatpush2.msra.mxu0 0.0
        %483 = vmatprep.subr.mxu0 0.0
        %484 = vmatpush2.msra.mxu0 0.0
        %485 = vmatprep.subr.mxu0 0.0
        %486 = vmatpush2.msra.mxu0 0.0
        %487 = vmatprep.subr.mxu0 0.0
        %488 = vmatpush2.msra.mxu0 0.0
        %489 = vmatprep.subr.mxu0 0.0
        %490 = vmatpush2.msra.mxu0 0.0
        %491 = vmatprep.mubr.f32.mxu0 0.0
        %492 = vmatmul.mubr.f32.gmra.mxu0 %v324
        %v493 = vpop.f32.mrf.mxu0
        %v494 = vadd.f32 0.0, %v493
        %v495 = vpop.f32.mrf.mxu0
        %496 = vdwg.mxu0
        %v497 = vld [vmem:[#allocation5 + $0x20] sm:$0xff]
        %v498 = vld [vmem:[#allocation5 + $0x50] sm:$0xff]
        %v499 = vld [vmem:[#allocation5 + $0x80] sm:$0xff]
        %v500 = vld [vmem:[#allocation5 + $0xb0] sm:$0xff]
        %v501 = vld [vmem:[#allocation5 + $0xe0] sm:$0xff]
        %v502 = vld [vmem:[#allocation5 + $0x110] sm:$0xff]
        %v503 = vld [vmem:[#allocation5 + $0x140] sm:$0xff]
        %v504 = vld [vmem:[#allocation5 + $0x170] sm:$0xff]
        %v505 = vld [vmem:[#allocation5 + $0x1a0] sm:$0xff]
        %v506 = vld [vmem:[#allocation5 + $0x1d0] sm:$0xff]
        %v507 = vld [vmem:[#allocation5 + $0x200] sm:$0xff]
        %v508 = vld [vmem:[#allocation5 + $0x230] sm:$0xff]
        %v509 = vld [vmem:[#allocation5 + $0x260] sm:$0xff]
        %v510 = vld [vmem:[#allocation5 + $0x290] sm:$0xff]
        %v511 = vld [vmem:[#allocation5 + $0x2c0] sm:$0xff]
        %v512 = vld [vmem:[#allocation5 + $0x2f0] sm:$0xff]
        %513 = vmatprep.subr.mxu0 0.0
        %514 = vmatpush1.msra.mxu0 %v512
        %515 = vmatprep.subr.mxu0 0.0
        %516 = vmatpush1.msra.mxu0 %v511
        %517 = vmatprep.subr.mxu0 0.0
        %518 = vmatpush1.msra.mxu0 %v510
        %519 = vmatprep.subr.mxu0 0.0
        %520 = vmatpush1.msra.mxu0 %v509
        %521 = vmatprep.subr.mxu0 0.0
        %522 = vmatpush1.msra.mxu0 %v508
        %523 = vmatprep.subr.mxu0 0.0
        %524 = vmatpush1.msra.mxu0 %v507
        %525 = vmatprep.subr.mxu0 0.0
        %526 = vmatpush1.msra.mxu0 %v506
        %527 = vmatprep.subr.mxu0 0.0
        %528 = vmatpush1.msra.mxu0 %v505
        %529 = vmatprep.subr.mxu0 0.0
        %530 = vmatpush1.msra.mxu0 %v504
        %531 = vmatprep.subr.mxu0 0.0
        %532 = vmatpush1.msra.mxu0 %v503
        %533 = vmatprep.subr.mxu0 0.0
        %534 = vmatpush1.msra.mxu0 %v502
        %535 = vmatprep.subr.mxu0 0.0
        %536 = vmatpush1.msra.mxu0 %v501
        %537 = vmatprep.subr.mxu0 0.0
        %538 = vmatpush1.msra.mxu0 %v500
        %539 = vmatprep.subr.mxu0 0.0
        %540 = vmatpush1.msra.mxu0 %v499
        %541 = vmatprep.subr.mxu0 0.0
        %542 = vmatpush1.msra.mxu0 %v498
        %543 = vmatprep.subr.mxu0 0.0
        %544 = vmatpush1.msra.mxu0 %v497
        %545 = vmatprep.subr.mxu0 0.0
        %546 = vmatpush2.msra.mxu0 0.0
        %547 = vmatprep.subr.mxu0 0.0
        %548 = vmatpush2.msra.mxu0 0.0
        %549 = vmatprep.subr.mxu0 0.0
        %550 = vmatpush2.msra.mxu0 0.0
        %551 = vmatprep.subr.mxu0 0.0
        %552 = vmatpush2.msra.mxu0 0.0
        %553 = vmatprep.subr.mxu0 0.0
        %554 = vmatpush2.msra.mxu0 0.0
        %555 = vmatprep.subr.mxu0 0.0
        %556 = vmatpush2.msra.mxu0 0.0
        %557 = vmatprep.subr.mxu0 0.0
        %558 = vmatpush2.msra.mxu0 0.0
        %559 = vmatprep.subr.mxu0 0.0
        %560 = vmatpush2.msra.mxu0 0.0
        %561 = vmatprep.subr.mxu0 0.0
        %562 = vmatpush2.msra.mxu0 0.0
        %563 = vmatprep.subr.mxu0 0.0
        %564 = vmatpush2.msra.mxu0 0.0
        %565 = vmatprep.subr.mxu0 0.0
        %566 = vmatpush2.msra.mxu0 0.0
        %567 = vmatprep.subr.mxu0 0.0
        %568 = vmatpush2.msra.mxu0 0.0
        %569 = vmatprep.subr.mxu0 0.0
        %570 = vmatpush2.msra.mxu0 0.0
        %571 = vmatprep.subr.mxu0 0.0
        %572 = vmatpush2.msra.mxu0 0.0
        %573 = vmatprep.subr.mxu0 0.0
        %574 = vmatpush2.msra.mxu0 0.0
        %575 = vmatprep.subr.mxu0 0.0
        %576 = vmatpush2.msra.mxu0 0.0
        %577 = vmatprep.mubr.f32.mxu0 0.0
        %578 = vmatmul.mubr.f32.gmra.mxu0 %v324
        %v579 = vpop.f32.mrf.mxu0
        %v580 = vadd.f32 0.0, %v579
        %v581 = vpop.f32.mrf.mxu0
        %582 = vdwg.mxu0
        %583 = vmatprep.subr.mxu0 0.0
        %584 = vmatpush1.xpose.msra.mxu0 0.0
        %585 = vmatprep.subr.mxu0 0.0
        %586 = vmatpush1.xpose.msra.mxu0 0.0
        %587 = vmatprep.subr.mxu0 0.0
        %588 = vmatpush1.xpose.msra.mxu0 0.0
        %589 = vmatprep.subr.mxu0 0.0
        %590 = vmatpush1.xpose.msra.mxu0 0.0
        %591 = vmatprep.subr.mxu0 0.0
        %592 = vmatpush1.xpose.msra.mxu0 0.0
        %593 = vmatprep.subr.mxu0 0.0
        %594 = vmatpush1.xpose.msra.mxu0 0.0
        %595 = vmatprep.subr.mxu0 0.0
        %596 = vmatpush1.xpose.msra.mxu0 0.0
        %597 = vmatprep.subr.mxu0 0.0
        %598 = vmatpush1.xpose.msra.mxu0 0.0
        %599 = vmatprep.subr.mxu0 0.0
        %600 = vmatpush1.xpose.msra.mxu0 0.0
        %601 = vmatprep.subr.mxu0 0.0
        %602 = vmatpush1.xpose.msra.mxu0 0.0
        %603 = vmatprep.subr.mxu0 0.0
        %604 = vmatpush1.xpose.msra.mxu0 0.0
        %605 = vmatprep.subr.mxu0 0.0
        %606 = vmatpush1.xpose.msra.mxu0 0.0
        %607 = vmatprep.subr.mxu0 0.0
        %608 = vmatpush1.xpose.msra.mxu0 0.0
        %609 = vmatprep.subr.mxu0 0.0
        %610 = vmatpush1.xpose.msra.mxu0 0.0
        %611 = vmatprep.subr.mxu0 0.0
        %612 = vmatpush1.xpose.msra.mxu0 0.0
        %613 = vmatprep.subr.mxu0 0.0
        %614 = vmatpush1.xpose.msra.mxu0 %v494
        %615 = vmatprep.subr.mxu0 0.0
        %616 = vmatpush2.xpose.msra.mxu0 0.0
        %617 = vmatprep.subr.mxu0 0.0
        %618 = vmatpush2.xpose.msra.mxu0 0.0
        %619 = vmatprep.subr.mxu0 0.0
        %620 = vmatpush2.xpose.msra.mxu0 0.0
        %621 = vmatprep.subr.mxu0 0.0
        %622 = vmatpush2.xpose.msra.mxu0 0.0
        %623 = vmatprep.subr.mxu0 0.0
        %624 = vmatpush2.xpose.msra.mxu0 0.0
        %625 = vmatprep.subr.mxu0 0.0
        %626 = vmatpush2.xpose.msra.mxu0 0.0
        %627 = vmatprep.subr.mxu0 0.0
        %628 = vmatpush2.xpose.msra.mxu0 0.0
        %629 = vmatprep.subr.mxu0 0.0
        %630 = vmatpush2.xpose.msra.mxu0 0.0
        %631 = vmatprep.subr.mxu0 0.0
        %632 = vmatpush2.xpose.msra.mxu0 0.0
        %633 = vmatprep.subr.mxu0 0.0
        %634 = vmatpush2.xpose.msra.mxu0 0.0
        %635 = vmatprep.subr.mxu0 0.0
        %636 = vmatpush2.xpose.msra.mxu0 0.0
        %637 = vmatprep.subr.mxu0 0.0
        %638 = vmatpush2.xpose.msra.mxu0 0.0
        %639 = vmatprep.subr.mxu0 0.0
        %640 = vmatpush2.xpose.msra.mxu0 0.0
        %641 = vmatprep.subr.mxu0 0.0
        %642 = vmatpush2.xpose.msra.mxu0 0.0
        %643 = vmatprep.subr.mxu0 0.0
        %644 = vmatpush2.xpose.msra.mxu0 0.0
        %645 = vmatprep.subr.mxu0 0.0
        %646 = vmatpush2.xpose.msra.mxu0 0.0
        %647 = vmatprep.mubr.f32.mxu0 0.0
        %648 = vmatmul.mubr.f32.gmra.mxu0 %v408
        %v649 = vpop.f32.mrf.mxu0
        %v650 = vadd.f32 0.0, %v649
        %v651 = vpop.f32.mrf.mxu0
        %652 = vdwg.mxu0
        %v653 = vmul.f32 %v650, 0.088388346
        %vm654 = vcmask 64512
        %v655 = vsel %vm654, %v653, -inf
        %656 = vmax.xlane.f32.xlu0 %v655
        %v657 = vpop.xlane.xlu0 %656
        %v658 = vsub.f32 %v653, %v657
        %v659 = vmul.f32 %v658, 1.442695
        %v660 = vpow.pop %v659
        %v661 = vsel %vm654, %v660, 0.0
        %662 = vadd.xlane.f32.xlu0 %v661
        %v663 = vpop.xlane.xlu0 %662
        %v664 = vrcp.pop %v663
        %v665 = vmul.f32 %v660, %v664
        %v667 = vsel %vm654, %v665, 0
        %669 = vmatprep.subr.mxu0 0.0
        %670 = vmatpush1.msra.mxu0 0.0
        %671 = vmatprep.subr.mxu0 0.0
        %672 = vmatpush1.msra.mxu0 0.0
        %673 = vmatprep.subr.mxu0 0.0
        %674 = vmatpush1.msra.mxu0 0.0
        %675 = vmatprep.subr.mxu0 0.0
        %676 = vmatpush1.msra.mxu0 0.0
        %677 = vmatprep.subr.mxu0 0.0
        %678 = vmatpush1.msra.mxu0 0.0
        %679 = vmatprep.subr.mxu0 0.0
        %680 = vmatpush1.msra.mxu0 0.0
        %681 = vmatprep.subr.mxu0 0.0
        %682 = vmatpush1.msra.mxu0 0.0
        %683 = vmatprep.subr.mxu0 0.0
        %684 = vmatpush1.msra.mxu0 0.0
        %685 = vmatprep.subr.mxu0 0.0
        %686 = vmatpush1.msra.mxu0 0.0
        %687 = vmatprep.subr.mxu0 0.0
        %688 = vmatpush1.msra.mxu0 0.0
        %689 = vmatprep.subr.mxu0 0.0
        %690 = vmatpush1.msra.mxu0 0.0
        %691 = vmatprep.subr.mxu0 0.0
        %692 = vmatpush1.msra.mxu0 0.0
        %693 = vmatprep.subr.mxu0 0.0
        %694 = vmatpush1.msra.mxu0 0.0
        %695 = vmatprep.subr.mxu0 0.0
        %696 = vmatpush1.msra.mxu0 0.0
        %697 = vmatprep.subr.mxu0 0.0
        %698 = vmatpush1.msra.mxu0 0.0
        %699 = vmatprep.subr.mxu0 0.0
        %700 = vmatpush1.msra.mxu0 %v580
        %701 = vmatprep.subr.mxu0 0.0
        %702 = vmatpush2.msra.mxu0 0.0
        %703 = vmatprep.subr.mxu0 0.0
        %704 = vmatpush2.msra.mxu0 0.0
        %705 = vmatprep.subr.mxu0 0.0
        %706 = vmatpush2.msra.mxu0 0.0
        %707 = vmatprep.subr.mxu0 0.0
        %708 = vmatpush2.msra.mxu0 0.0
        %709 = vmatprep.subr.mxu0 0.0
        %710 = vmatpush2.msra.mxu0 0.0
        %711 = vmatprep.subr.mxu0 0.0
        %712 = vmatpush2.msra.mxu0 0.0
        %713 = vmatprep.subr.mxu0 0.0
        %714 = vmatpush2.msra.mxu0 0.0
        %715 = vmatprep.subr.mxu0 0.0
        %716 = vmatpush2.msra.mxu0 0.0
        %717 = vmatprep.subr.mxu0 0.0
        %718 = vmatpush2.msra.mxu0 0.0
        %719 = vmatprep.subr.mxu0 0.0
        %720 = vmatpush2.msra.mxu0 0.0
        %721 = vmatprep.subr.mxu0 0.0
        %722 = vmatpush2.msra.mxu0 0.0
        %723 = vmatprep.subr.mxu0 0.0
        %724 = vmatpush2.msra.mxu0 0.0
        %725 = vmatprep.subr.mxu0 0.0
        %726 = vmatpush2.msra.mxu0 0.0
        %727 = vmatprep.subr.mxu0 0.0
        %728 = vmatpush2.msra.mxu0 0.0
        %729 = vmatprep.subr.mxu0 0.0
        %730 = vmatpush2.msra.mxu0 0.0
        %731 = vmatprep.subr.mxu0 0.0
        %732 = vmatpush2.msra.mxu0 0.0
        %733 = vmatprep.mubr.f32.mxu0 0.0
        %734 = vmatmul.mubr.f32.gmra.mxu0 %v667
        %v735 = vpop.f32.mrf.mxu0
        %v736 = vadd.f32 0.0, %v735
        %v737 = vpop.f32.mrf.mxu0
        %738 = vdwg.mxu0
        %v739 = vld [vmem:[#allocation7] sm:$0xff]
        %v740 = vld [vmem:[#allocation7 + $0x8] sm:$0xff]
        %v741 = vld [vmem:[#allocation7 + $0x10] sm:$0xff]
        %v742 = vld [vmem:[#allocation7 + $0x18] sm:$0xff]
        %v743 = vld [vmem:[#allocation7 + $0x20] sm:$0xff]
        %v744 = vld [vmem:[#allocation7 + $0x28] sm:$0xff]
        %v745 = vld [vmem:[#allocation7 + $0x30] sm:$0xff]
        %v746 = vld [vmem:[#allocation7 + $0x38] sm:$0xff]
        %v747 = vld [vmem:[#allocation7 + $0x40] sm:$0xff]
        %v748 = vld [vmem:[#allocation7 + $0x48] sm:$0xff]
        %v749 = vld [vmem:[#allocation7 + $0x50] sm:$0xff]
        %v750 = vld [vmem:[#allocation7 + $0x58] sm:$0xff]
        %v751 = vld [vmem:[#allocation7 + $0x60] sm:$0xff]
        %v752 = vld [vmem:[#allocation7 + $0x68] sm:$0xff]
        %v753 = vld [vmem:[#allocation7 + $0x70] sm:$0xff]
        %v754 = vld [vmem:[#allocation7 + $0x78] sm:$0xff]
        %v755 = vld [vmem:[#allocation5 + $0x8] sm:$0xff]
        %v756 = vld [vmem:[#allocation5 + $0x38] sm:$0xff]
        %v757 = vld [vmem:[#allocation5 + $0x68] sm:$0xff]
        %v758 = vld [vmem:[#allocation5 + $0x98] sm:$0xff]
        %v759 = vld [vmem:[#allocation5 + $0xc8] sm:$0xff]
        %v760 = vld [vmem:[#allocation5 + $0xf8] sm:$0xff]
        %v761 = vld [vmem:[#allocation5 + $0x128] sm:$0xff]
        %v762 = vld [vmem:[#allocation5 + $0x158] sm:$0xff]
        %v763 = vld [vmem:[#allocation5 + $0x188] sm:$0xff]
        %v764 = vld [vmem:[#allocation5 + $0x1b8] sm:$0xff]
        %v765 = vld [vmem:[#allocation5 + $0x1e8] sm:$0xff]
        %v766 = vld [vmem:[#allocation5 + $0x218] sm:$0xff]
        %v767 = vld [vmem:[#allocation5 + $0x248] sm:$0xff]
        %v768 = vld [vmem:[#allocation5 + $0x278] sm:$0xff]
        %v769 = vld [vmem:[#allocation5 + $0x2a8] sm:$0xff]
        %v770 = vld [vmem:[#allocation5 + $0x2d8] sm:$0xff]
        %771 = vmatprep.subr.mxu0 0.0
        %772 = vmatpush1.msra.mxu0 %v770
        %773 = vmatprep.subr.mxu0 0.0
        %774 = vmatpush1.msra.mxu0 %v769
        %775 = vmatprep.subr.mxu0 0.0
        %776 = vmatpush1.msra.mxu0 %v768
        %777 = vmatprep.subr.mxu0 0.0
        %778 = vmatpush1.msra.mxu0 %v767
        %779 = vmatprep.subr.mxu0 0.0
        %780 = vmatpush1.msra.mxu0 %v766
        %781 = vmatprep.subr.mxu0 0.0
        %782 = vmatpush1.msra.mxu0 %v765
        %783 = vmatprep.subr.mxu0 0.0
        %784 = vmatpush1.msra.mxu0 %v764
        %785 = vmatprep.subr.mxu0 0.0
        %786 = vmatpush1.msra.mxu0 %v763
        %787 = vmatprep.subr.mxu0 0.0
        %788 = vmatpush1.msra.mxu0 %v762
        %789 = vmatprep.subr.mxu0 0.0
        %790 = vmatpush1.msra.mxu0 %v761
        %791 = vmatprep.subr.mxu0 0.0
        %792 = vmatpush1.msra.mxu0 %v760
        %793 = vmatprep.subr.mxu0 0.0
        %794 = vmatpush1.msra.mxu0 %v759
        %795 = vmatprep.subr.mxu0 0.0
        %796 = vmatpush1.msra.mxu0 %v758
        %797 = vmatprep.subr.mxu0 0.0
        %798 = vmatpush1.msra.mxu0 %v757
        %799 = vmatprep.subr.mxu0 0.0
        %800 = vmatpush1.msra.mxu0 %v756
        %801 = vmatprep.subr.mxu0 0.0
        %802 = vmatpush1.msra.mxu0 %v755
        %803 = vmatprep.subr.mxu0 0.0
        %804 = vmatpush2.msra.mxu0 0.0
        %805 = vmatprep.subr.mxu0 0.0
        %806 = vmatpush2.msra.mxu0 0.0
        %807 = vmatprep.subr.mxu0 0.0
        %808 = vmatpush2.msra.mxu0 0.0
        %809 = vmatprep.subr.mxu0 0.0
        %810 = vmatpush2.msra.mxu0 0.0
        %811 = vmatprep.subr.mxu0 0.0
        %812 = vmatpush2.msra.mxu0 0.0
        %813 = vmatprep.subr.mxu0 0.0
        %814 = vmatpush2.msra.mxu0 0.0
        %815 = vmatprep.subr.mxu0 0.0
        %816 = vmatpush2.msra.mxu0 0.0
        %817 = vmatprep.subr.mxu0 0.0
        %818 = vmatpush2.msra.mxu0 0.0
        %819 = vmatprep.subr.mxu0 0.0
        %820 = vmatpush2.msra.mxu0 0.0
        %821 = vmatprep.subr.mxu0 0.0
        %822 = vmatpush2.msra.mxu0 0.0
        %823 = vmatprep.subr.mxu0 0.0
        %824 = vmatpush2.msra.mxu0 0.0
        %825 = vmatprep.subr.mxu0 0.0
        %826 = vmatpush2.msra.mxu0 0.0
        %827 = vmatprep.subr.mxu0 0.0
        %828 = vmatpush2.msra.mxu0 0.0
        %829 = vmatprep.subr.mxu0 0.0
        %830 = vmatpush2.msra.mxu0 0.0
        %831 = vmatprep.subr.mxu0 0.0
        %832 = vmatpush2.msra.mxu0 0.0
        %833 = vmatprep.subr.mxu0 0.0
        %834 = vmatpush2.msra.mxu0 0.0
        %835 = vmatprep.mubr.f32.mxu0 0.0
        %836 = vmatmul.mubr.f32.gmra.mxu0 %v324
        %v837 = vpop.f32.mrf.mxu0
        %v838 = vadd.f32 0.0, %v837
        %v839 = vpop.f32.mrf.mxu0
        %840 = vdwg.mxu0
        %v841 = vld [vmem:[#allocation5 + $0x18] sm:$0xff]
        %v842 = vld [vmem:[#allocation5 + $0x48] sm:$0xff]
        %v843 = vld [vmem:[#allocation5 + $0x78] sm:$0xff]
        %v844 = vld [vmem:[#allocation5 + $0xa8] sm:$0xff]
        %v845 = vld [vmem:[#allocation5 + $0xd8] sm:$0xff]
        %v846 = vld [vmem:[#allocation5 + $0x108] sm:$0xff]
        %v847 = vld [vmem:[#allocation5 + $0x138] sm:$0xff]
        %v848 = vld [vmem:[#allocation5 + $0x168] sm:$0xff]
        %v849 = vld [vmem:[#allocation5 + $0x198] sm:$0xff]
        %v850 = vld [vmem:[#allocation5 + $0x1c8] sm:$0xff]
        %v851 = vld [vmem:[#allocation5 + $0x1f8] sm:$0xff]
        %v852 = vld [vmem:[#allocation5 + $0x228] sm:$0xff]
        %v853 = vld [vmem:[#allocation5 + $0x258] sm:$0xff]
        %v854 = vld [vmem:[#allocation5 + $0x288] sm:$0xff]
        %v855 = vld [vmem:[#allocation5 + $0x2b8] sm:$0xff]
        %v856 = vld [vmem:[#allocation5 + $0x2e8] sm:$0xff]
        %857 = vmatprep.subr.mxu0 0.0
        %858 = vmatpush1.msra.mxu0 %v856
        %859 = vmatprep.subr.mxu0 0.0
        %860 = vmatpush1.msra.mxu0 %v855
        %861 = vmatprep.subr.mxu0 0.0
        %862 = vmatpush1.msra.mxu0 %v854
        %863 = vmatprep.subr.mxu0 0.0
        %864 = vmatpush1.msra.mxu0 %v853
        %865 = vmatprep.subr.mxu0 0.0
        %866 = vmatpush1.msra.mxu0 %v852
        %867 = vmatprep.subr.mxu0 0.0
        %868 = vmatpush1.msra.mxu0 %v851
        %869 = vmatprep.subr.mxu0 0.0
        %870 = vmatpush1.msra.mxu0 %v850
        %871 = vmatprep.subr.mxu0 0.0
        %872 = vmatpush1.msra.mxu0 %v849
        %873 = vmatprep.subr.mxu0 0.0
        %874 = vmatpush1.msra.mxu0 %v848
        %875 = vmatprep.subr.mxu0 0.0
        %876 = vmatpush1.msra.mxu0 %v847
        %877 = vmatprep.subr.mxu0 0.0
        %878 = vmatpush1.msra.mxu0 %v846
        %879 = vmatprep.subr.mxu0 0.0
        %880 = vmatpush1.msra.mxu0 %v845
        %881 = vmatprep.subr.mxu0 0.0
        %882 = vmatpush1.msra.mxu0 %v844
        %883 = vmatprep.subr.mxu0 0.0
        %884 = vmatpush1.msra.mxu0 %v843
        %885 = vmatprep.subr.mxu0 0.0
        %886 = vmatpush1.msra.mxu0 %v842
        %887 = vmatprep.subr.mxu0 0.0
        %888 = vmatpush1.msra.mxu0 %v841
        %889 = vmatprep.subr.mxu0 0.0
        %890 = vmatpush2.msra.mxu0 0.0
        %891 = vmatprep.subr.mxu0 0.0
        %892 = vmatpush2.msra.mxu0 0.0
        %893 = vmatprep.subr.mxu0 0.0
        %894 = vmatpush2.msra.mxu0 0.0
        %895 = vmatprep.subr.mxu0 0.0
        %896 = vmatpush2.msra.mxu0 0.0
        %897 = vmatprep.subr.mxu0 0.0
        %898 = vmatpush2.msra.mxu0 0.0
        %899 = vmatprep.subr.mxu0 0.0
        %900 = vmatpush2.msra.mxu0 0.0
        %901 = vmatprep.subr.mxu0 0.0
        %902 = vmatpush2.msra.mxu0 0.0
        %903 = vmatprep.subr.mxu0 0.0
        %904 = vmatpush2.msra.mxu0 0.0
        %905 = vmatprep.subr.mxu0 0.0
        %906 = vmatpush2.msra.mxu0 0.0
        %907 = vmatprep.subr.mxu0 0.0
        %908 = vmatpush2.msra.mxu0 0.0
        %909 = vmatprep.subr.mxu0 0.0
        %910 = vmatpush2.msra.mxu0 0.0
        %911 = vmatprep.subr.mxu0 0.0
        %912 = vmatpush2.msra.mxu0 0.0
        %913 = vmatprep.subr.mxu0 0.0
        %914 = vmatpush2.msra.mxu0 0.0
        %915 = vmatprep.subr.mxu0 0.0
        %916 = vmatpush2.msra.mxu0 0.0
        %917 = vmatprep.subr.mxu0 0.0
        %918 = vmatpush2.msra.mxu0 0.0
        %919 = vmatprep.subr.mxu0 0.0
        %920 = vmatpush2.msra.mxu0 0.0
        %921 = vmatprep.mubr.f32.mxu0 0.0
        %922 = vmatmul.mubr.f32.gmra.mxu0 %v324
        %v923 = vpop.f32.mrf.mxu0
        %v924 = vadd.f32 0.0, %v923
        %v925 = vpop.f32.mrf.mxu0
        %926 = vdwg.mxu0
        %v927 = vld [vmem:[#allocation5 + $0x28] sm:$0xff]
        %v928 = vld [vmem:[#allocation5 + $0x58] sm:$0xff]
        %v929 = vld [vmem:[#allocation5 + $0x88] sm:$0xff]
        %v930 = vld [vmem:[#allocation5 + $0xb8] sm:$0xff]
        %v931 = vld [vmem:[#allocation5 + $0xe8] sm:$0xff]
        %v932 = vld [vmem:[#allocation5 + $0x118] sm:$0xff]
        %v933 = vld [vmem:[#allocation5 + $0x148] sm:$0xff]
        %v934 = vld [vmem:[#allocation5 + $0x178] sm:$0xff]
        %v935 = vld [vmem:[#allocation5 + $0x1a8] sm:$0xff]
        %v936 = vld [vmem:[#allocation5 + $0x1d8] sm:$0xff]
        %v937 = vld [vmem:[#allocation5 + $0x208] sm:$0xff]
        %v938 = vld [vmem:[#allocation5 + $0x238] sm:$0xff]
        %v939 = vld [vmem:[#allocation5 + $0x268] sm:$0xff]
        %v940 = vld [vmem:[#allocation5 + $0x298] sm:$0xff]
        %v941 = vld [vmem:[#allocation5 + $0x2c8] sm:$0xff]
        %v942 = vld [vmem:[#allocation5 + $0x2f8] sm:$0xff]
        %943 = vmatprep.subr.mxu0 0.0
        %944 = vmatpush1.msra.mxu0 %v942
        %945 = vmatprep.subr.mxu0 0.0
        %946 = vmatpush1.msra.mxu0 %v941
        %947 = vmatprep.subr.mxu0 0.0
        %948 = vmatpush1.msra.mxu0 %v940
        %949 = vmatprep.subr.mxu0 0.0
        %950 = vmatpush1.msra.mxu0 %v939
        %951 = vmatprep.subr.mxu0 0.0
        %952 = vmatpush1.msra.mxu0 %v938
        %953 = vmatprep.subr.mxu0 0.0
        %954 = vmatpush1.msra.mxu0 %v937
        %955 = vmatprep.subr.mxu0 0.0
        %956 = vmatpush1.msra.mxu0 %v936
        %957 = vmatprep.subr.mxu0 0.0
        %958 = vmatpush1.msra.mxu0 %v935
        %959 = vmatprep.subr.mxu0 0.0
        %960 = vmatpush1.msra.mxu0 %v934
        %961 = vmatprep.subr.mxu0 0.0
        %962 = vmatpush1.msra.mxu0 %v933
        %963 = vmatprep.subr.mxu0 0.0
        %964 = vmatpush1.msra.mxu0 %v932
        %965 = vmatprep.subr.mxu0 0.0
        %966 = vmatpush1.msra.mxu0 %v931
        %967 = vmatprep.subr.mxu0 0.0
        %968 = vmatpush1.msra.mxu0 %v930
        %969 = vmatprep.subr.mxu0 0.0
        %970 = vmatpush1.msra.mxu0 %v929
        %971 = vmatprep.subr.mxu0 0.0
        %972 = vmatpush1.msra.mxu0 %v928
        %973 = vmatprep.subr.mxu0 0.0
        %974 = vmatpush1.msra.mxu0 %v927
        %975 = vmatprep.subr.mxu0 0.0
        %976 = vmatpush2.msra.mxu0 0.0
        %977 = vmatprep.subr.mxu0 0.0
        %978 = vmatpush2.msra.mxu0 0.0
        %979 = vmatprep.subr.mxu0 0.0
        %980 = vmatpush2.msra.mxu0 0.0
        %981 = vmatprep.subr.mxu0 0.0
        %982 = vmatpush2.msra.mxu0 0.0
        %983 = vmatprep.subr.mxu0 0.0
        %984 = vmatpush2.msra.mxu0 0.0
        %985 = vmatprep.subr.mxu0 0.0
        %986 = vmatpush2.msra.mxu0 0.0
        %987 = vmatprep.subr.mxu0 0.0
        %988 = vmatpush2.msra.mxu0 0.0
        %989 = vmatprep.subr.mxu0 0.0
        %990 = vmatpush2.msra.mxu0 0.0
        %991 = vmatprep.subr.mxu0 0.0
        %992 = vmatpush2.msra.mxu0 0.0
        %993 = vmatprep.subr.mxu0 0.0
        %994 = vmatpush2.msra.mxu0 0.0
        %995 = vmatprep.subr.mxu0 0.0
        %996 = vmatpush2.msra.mxu0 0.0
        %997 = vmatprep.subr.mxu0 0.0
        %998 = vmatpush2.msra.mxu0 0.0
        %999 = vmatprep.subr.mxu0 0.0
        %1000 = vmatpush2.msra.mxu0 0.0
        %1001 = vmatprep.subr.mxu0 0.0
        %1002 = vmatpush2.msra.mxu0 0.0
        %1003 = vmatprep.subr.mxu0 0.0
        %1004 = vmatpush2.msra.mxu0 0.0
        %1005 = vmatprep.subr.mxu0 0.0
        %1006 = vmatpush2.msra.mxu0 0.0
        %1007 = vmatprep.mubr.f32.mxu0 0.0
        %1008 = vmatmul.mubr.f32.gmra.mxu0 %v324
        %v1009 = vpop.f32.mrf.mxu0
        %v1010 = vadd.f32 0.0, %v1009
        %v1011 = vpop.f32.mrf.mxu0
        %1012 = vdwg.mxu0
        %1013 = vmatprep.subr.mxu0 0.0
        %1014 = vmatpush1.xpose.msra.mxu0 0.0
        %1015 = vmatprep.subr.mxu0 0.0
        %1016 = vmatpush1.xpose.msra.mxu0 0.0
        %1017 = vmatprep.subr.mxu0 0.0
        %1018 = vmatpush1.xpose.msra.mxu0 0.0
        %1019 = vmatprep.subr.mxu0 0.0
        %1020 = vmatpush1.xpose.msra.mxu0 0.0
        %1021 = vmatprep.subr.mxu0 0.0
        %1022 = vmatpush1.xpose.msra.mxu0 0.0
        %1023 = vmatprep.subr.mxu0 0.0
        %1024 = vmatpush1.xpose.msra.mxu0 0.0
        %1025 = vmatprep.subr.mxu0 0.0
        %1026 = vmatpush1.xpose.msra.mxu0 0.0
        %1027 = vmatprep.subr.mxu0 0.0
        %1028 = vmatpush1.xpose.msra.mxu0 0.0
        %1029 = vmatprep.subr.mxu0 0.0
        %1030 = vmatpush1.xpose.msra.mxu0 0.0
        %1031 = vmatprep.subr.mxu0 0.0
        %1032 = vmatpush1.xpose.msra.mxu0 0.0
        %1033 = vmatprep.subr.mxu0 0.0
        %1034 = vmatpush1.xpose.msra.mxu0 0.0
        %1035 = vmatprep.subr.mxu0 0.0
        %1036 = vmatpush1.xpose.msra.mxu0 0.0
        %1037 = vmatprep.subr.mxu0 0.0
        %1038 = vmatpush1.xpose.msra.mxu0 0.0
        %1039 = vmatprep.subr.mxu0 0.0
        %1040 = vmatpush1.xpose.msra.mxu0 0.0
        %1041 = vmatprep.subr.mxu0 0.0
        %1042 = vmatpush1.xpose.msra.mxu0 0.0
        %1043 = vmatprep.subr.mxu0 0.0
        %1044 = vmatpush1.xpose.msra.mxu0 %v924
        %1045 = vmatprep.subr.mxu0 0.0
        %1046 = vmatpush2.xpose.msra.mxu0 0.0
        %1047 = vmatprep.subr.mxu0 0.0
        %1048 = vmatpush2.xpose.msra.mxu0 0.0
        %1049 = vmatprep.subr.mxu0 0.0
        %1050 = vmatpush2.xpose.msra.mxu0 0.0
        %1051 = vmatprep.subr.mxu0 0.0
        %1052 = vmatpush2.xpose.msra.mxu0 0.0
        %1053 = vmatprep.subr.mxu0 0.0
        %1054 = vmatpush2.xpose.msra.mxu0 0.0
        %1055 = vmatprep.subr.mxu0 0.0
        %1056 = vmatpush2.xpose.msra.mxu0 0.0
        %1057 = vmatprep.subr.mxu0 0.0
        %1058 = vmatpush2.xpose.msra.mxu0 0.0
        %1059 = vmatprep.subr.mxu0 0.0
        %1060 = vmatpush2.xpose.msra.mxu0 0.0
        %1061 = vmatprep.subr.mxu0 0.0
        %1062 = vmatpush2.xpose.msra.mxu0 0.0
        %1063 = vmatprep.subr.mxu0 0.0
        %1064 = vmatpush2.xpose.msra.mxu0 0.0
        %1065 = vmatprep.subr.mxu0 0.0
        %1066 = vmatpush2.xpose.msra.mxu0 0.0
        %1067 = vmatprep.subr.mxu0 0.0
        %1068 = vmatpush2.xpose.msra.mxu0 0.0
        %1069 = vmatprep.subr.mxu0 0.0
        %1070 = vmatpush2.xpose.msra.mxu0 0.0
        %1071 = vmatprep.subr.mxu0 0.0
        %1072 = vmatpush2.xpose.msra.mxu0 0.0
        %1073 = vmatprep.subr.mxu0 0.0
        %1074 = vmatpush2.xpose.msra.mxu0 0.0
        %1075 = vmatprep.subr.mxu0 0.0
        %1076 = vmatpush2.xpose.msra.mxu0 0.0
        %1077 = vmatprep.mubr.f32.mxu0 0.0
        %1078 = vmatmul.mubr.f32.gmra.mxu0 %v838
        %v1079 = vpop.f32.mrf.mxu0
        %v1080 = vadd.f32 0.0, %v1079
        %v1081 = vpop.f32.mrf.mxu0
        %1082 = vdwg.mxu0
        %v1083 = vmul.f32 %v1080, 0.088388346
        %v1084 = vsel %vm654, %v1083, -inf
        %1085 = vmax.xlane.f32.xlu0 %v1084
        %v1086 = vpop.xlane.xlu0 %1085
        %v1087 = vsub.f32 %v1083, %v1086
        %v1088 = vmul.f32 %v1087, 1.442695
        %v1089 = vpow.pop %v1088
        %v1090 = vsel %vm654, %v1089, 0.0
        %1091 = vadd.xlane.f32.xlu0 %v1090
        %v1092 = vpop.xlane.xlu0 %1091
        %v1093 = vrcp.pop %v1092
        %v1094 = vmul.f32 %v1089, %v1093
        %v1096 = vsel %vm654, %v1094, 0
        %1098 = vmatprep.subr.mxu0 0.0
        %1099 = vmatpush1.msra.mxu0 0.0
        %1100 = vmatprep.subr.mxu0 0.0
        %1101 = vmatpush1.msra.mxu0 0.0
        %1102 = vmatprep.subr.mxu0 0.0
        %1103 = vmatpush1.msra.mxu0 0.0
        %1104 = vmatprep.subr.mxu0 0.0
        %1105 = vmatpush1.msra.mxu0 0.0
        %1106 = vmatprep.subr.mxu0 0.0
        %1107 = vmatpush1.msra.mxu0 0.0
        %1108 = vmatprep.subr.mxu0 0.0
        %1109 = vmatpush1.msra.mxu0 0.0
        %1110 = vmatprep.subr.mxu0 0.0
        %1111 = vmatpush1.msra.mxu0 0.0
        %1112 = vmatprep.subr.mxu0 0.0
        %1113 = vmatpush1.msra.mxu0 0.0
        %1114 = vmatprep.subr.mxu0 0.0
        %1115 = vmatpush1.msra.mxu0 0.0
        %1116 = vmatprep.subr.mxu0 0.0
        %1117 = vmatpush1.msra.mxu0 0.0
        %1118 = vmatprep.subr.mxu0 0.0
        %1119 = vmatpush1.msra.mxu0 0.0
        %1120 = vmatprep.subr.mxu0 0.0
        %1121 = vmatpush1.msra.mxu0 0.0
        %1122 = vmatprep.subr.mxu0 0.0
        %1123 = vmatpush1.msra.mxu0 0.0
        %1124 = vmatprep.subr.mxu0 0.0
        %1125 = vmatpush1.msra.mxu0 0.0
        %1126 = vmatprep.subr.mxu0 0.0
        %1127 = vmatpush1.msra.mxu0 0.0
        %1128 = vmatprep.subr.mxu0 0.0
        %1129 = vmatpush1.msra.mxu0 %v1010
        %1130 = vmatprep.subr.mxu0 0.0
        %1131 = vmatpush2.msra.mxu0 0.0
        %1132 = vmatprep.subr.mxu0 0.0
        %1133 = vmatpush2.msra.mxu0 0.0
        %1134 = vmatprep.subr.mxu0 0.0
        %1135 = vmatpush2.msra.mxu0 0.0
        %1136 = vmatprep.subr.mxu0 0.0
        %1137 = vmatpush2.msra.mxu0 0.0
        %1138 = vmatprep.subr.mxu0 0.0
        %1139 = vmatpush2.msra.mxu0 0.0
        %1140 = vmatprep.subr.mxu0 0.0
        %1141 = vmatpush2.msra.mxu0 0.0
        %1142 = vmatprep.subr.mxu0 0.0
        %1143 = vmatpush2.msra.mxu0 0.0
        %1144 = vmatprep.subr.mxu0 0.0
        %1145 = vmatpush2.msra.mxu0 0.0
        %1146 = vmatprep.subr.mxu0 0.0
        %1147 = vmatpush2.msra.mxu0 0.0
        %1148 = vmatprep.subr.mxu0 0.0
        %1149 = vmatpush2.msra.mxu0 0.0
        %1150 = vmatprep.subr.mxu0 0.0
        %1151 = vmatpush2.msra.mxu0 0.0
        %1152 = vmatprep.subr.mxu0 0.0
        %1153 = vmatpush2.msra.mxu0 0.0
        %1154 = vmatprep.subr.mxu0 0.0
        %1155 = vmatpush2.msra.mxu0 0.0
        %1156 = vmatprep.subr.mxu0 0.0
        %1157 = vmatpush2.msra.mxu0 0.0
        %1158 = vmatprep.subr.mxu0 0.0
        %1159 = vmatpush2.msra.mxu0 0.0
        %1160 = vmatprep.subr.mxu0 0.0
        %1161 = vmatpush2.msra.mxu0 0.0
        %1162 = vmatprep.mubr.f32.mxu0 0.0
        %1163 = vmatmul.mubr.f32.gmra.mxu0 %v1096
        %v1164 = vpop.f32.mrf.mxu0
        %v1165 = vadd.f32 0.0, %v1164
        %v1166 = vpop.f32.mrf.mxu0
        %1167 = vdwg.mxu0
        %v1168 = vld [vmem:[#allocation7 + $0x80] sm:$0xff]
        %v1169 = vld [vmem:[#allocation7 + $0x88] sm:$0xff]
        %v1170 = vld [vmem:[#allocation7 + $0x90] sm:$0xff]
        %v1171 = vld [vmem:[#allocation7 + $0x98] sm:$0xff]
        %v1172 = vld [vmem:[#allocation7 + $0xa0] sm:$0xff]
        %v1173 = vld [vmem:[#allocation7 + $0xa8] sm:$0xff]
        %v1174 = vld [vmem:[#allocation7 + $0xb0] sm:$0xff]
        %v1175 = vld [vmem:[#allocation7 + $0xb8] sm:$0xff]
        %v1176 = vld [vmem:[#allocation7 + $0xc0] sm:$0xff]
        %v1177 = vld [vmem:[#allocation7 + $0xc8] sm:$0xff]
        %v1178 = vld [vmem:[#allocation7 + $0xd0] sm:$0xff]
        %v1179 = vld [vmem:[#allocation7 + $0xd8] sm:$0xff]
        %v1180 = vld [vmem:[#allocation7 + $0xe0] sm:$0xff]
        %v1181 = vld [vmem:[#allocation7 + $0xe8] sm:$0xff]
        %v1182 = vld [vmem:[#allocation7 + $0xf0] sm:$0xff]
        %v1183 = vld [vmem:[#allocation7 + $0xf8] sm:$0xff]
        %1184 = vmatprep.subr.mxu0 0.0
        %1185 = vmatpush1.msra.mxu0 %v1183
        %1186 = vmatprep.subr.mxu0 0.0
        %1187 = vmatpush1.msra.mxu0 %v1182
        %1188 = vmatprep.subr.mxu0 0.0
        %1189 = vmatpush1.msra.mxu0 %v1181
        %1190 = vmatprep.subr.mxu0 0.0
        %1191 = vmatpush1.msra.mxu0 %v1180
        %1192 = vmatprep.subr.mxu0 0.0
        %1193 = vmatpush1.msra.mxu0 %v1179
        %1194 = vmatprep.subr.mxu0 0.0
        %1195 = vmatpush1.msra.mxu0 %v1178
        %1196 = vmatprep.subr.mxu0 0.0
        %1197 = vmatpush1.msra.mxu0 %v1177
        %1198 = vmatprep.subr.mxu0 0.0
        %1199 = vmatpush1.msra.mxu0 %v1176
        %1200 = vmatprep.subr.mxu0 0.0
        %1201 = vmatpush1.msra.mxu0 %v1175
        %1202 = vmatprep.subr.mxu0 0.0
        %1203 = vmatpush1.msra.mxu0 %v1174
        %1204 = vmatprep.subr.mxu0 0.0
        %1205 = vmatpush1.msra.mxu0 %v1173
        %1206 = vmatprep.subr.mxu0 0.0
        %1207 = vmatpush1.msra.mxu0 %v1172
        %1208 = vmatprep.subr.mxu0 0.0
        %1209 = vmatpush1.msra.mxu0 %v1171
        %1210 = vmatprep.subr.mxu0 0.0
        %1211 = vmatpush1.msra.mxu0 %v1170
        %1212 = vmatprep.subr.mxu0 0.0
        %1213 = vmatpush1.msra.mxu0 %v1169
        %1214 = vmatprep.subr.mxu0 0.0
        %1215 = vmatpush1.msra.mxu0 %v1168
        %1216 = vmatprep.subr.mxu0 0.0
        %1217 = vmatpush2.msra.mxu0 0.0
        %1218 = vmatprep.subr.mxu0 0.0
        %1219 = vmatpush2.msra.mxu0 0.0
        %1220 = vmatprep.subr.mxu0 0.0
        %1221 = vmatpush2.msra.mxu0 0.0
        %1222 = vmatprep.subr.mxu0 0.0
        %1223 = vmatpush2.msra.mxu0 0.0
        %1224 = vmatprep.subr.mxu0 0.0
        %1225 = vmatpush2.msra.mxu0 0.0
        %1226 = vmatprep.subr.mxu0 0.0
        %1227 = vmatpush2.msra.mxu0 0.0
        %1228 = vmatprep.subr.mxu0 0.0
        %1229 = vmatpush2.msra.mxu0 0.0
        %1230 = vmatprep.subr.mxu0 0.0
        %1231 = vmatpush2.msra.mxu0 0.0
        %1232 = vmatprep.subr.mxu0 0.0
        %1233 = vmatpush2.msra.mxu0 0.0
        %1234 = vmatprep.subr.mxu0 0.0
        %1235 = vmatpush2.msra.mxu0 0.0
        %1236 = vmatprep.subr.mxu0 0.0
        %1237 = vmatpush2.msra.mxu0 0.0
        %1238 = vmatprep.subr.mxu0 0.0
        %1239 = vmatpush2.msra.mxu0 0.0
        %1240 = vmatprep.subr.mxu0 0.0
        %1241 = vmatpush2.msra.mxu0 0.0
        %1242 = vmatprep.subr.mxu0 0.0
        %1243 = vmatpush2.msra.mxu0 0.0
        %1244 = vmatprep.subr.mxu0 0.0
        %1245 = vmatpush2.msra.mxu0 0.0
        %1246 = vmatprep.subr.mxu0 0.0
        %1247 = vmatpush2.msra.mxu0 0.0
        %1248 = vmatprep.mubr.f32.mxu0 0.0
        %1249 = vmatmul.mubr.f32.gmra.mxu0 %v1165
        %v1250 = vpop.f32.mrf.mxu0
        %v1251 = vadd.f32 0.0, %v1250
        %v1252 = vpop.f32.mrf.mxu0
        %1253 = vdwg.mxu0
        %1254 = vmatprep.subr.mxu0 0.0
        %1255 = vmatpush1.msra.mxu0 %v754
        %1256 = vmatprep.subr.mxu0 0.0
        %1257 = vmatpush1.msra.mxu0 %v753
        %1258 = vmatprep.subr.mxu0 0.0
        %1259 = vmatpush1.msra.mxu0 %v752
        %1260 = vmatprep.subr.mxu0 0.0
        %1261 = vmatpush1.msra.mxu0 %v751
        %1262 = vmatprep.subr.mxu0 0.0
        %1263 = vmatpush1.msra.mxu0 %v750
        %1264 = vmatprep.subr.mxu0 0.0
        %1265 = vmatpush1.msra.mxu0 %v749
        %1266 = vmatprep.subr.mxu0 0.0
        %1267 = vmatpush1.msra.mxu0 %v748
        %1268 = vmatprep.subr.mxu0 0.0
        %1269 = vmatpush1.msra.mxu0 %v747
        %1270 = vmatprep.subr.mxu0 0.0
        %1271 = vmatpush1.msra.mxu0 %v746
        %1272 = vmatprep.subr.mxu0 0.0
        %1273 = vmatpush1.msra.mxu0 %v745
        %1274 = vmatprep.subr.mxu0 0.0
        %1275 = vmatpush1.msra.mxu0 %v744
        %1276 = vmatprep.subr.mxu0 0.0
        %1277 = vmatpush1.msra.mxu0 %v743
        %1278 = vmatprep.subr.mxu0 0.0
        %1279 = vmatpush1.msra.mxu0 %v742
        %1280 = vmatprep.subr.mxu0 0.0
        %1281 = vmatpush1.msra.mxu0 %v741
        %1282 = vmatprep.subr.mxu0 0.0
        %1283 = vmatpush1.msra.mxu0 %v740
        %1284 = vmatprep.subr.mxu0 0.0
        %1285 = vmatpush1.msra.mxu0 %v739
        %1286 = vmatprep.subr.mxu0 0.0
        %1287 = vmatpush2.msra.mxu0 0.0
        %1288 = vmatprep.subr.mxu0 0.0
        %1289 = vmatpush2.msra.mxu0 0.0
        %1290 = vmatprep.subr.mxu0 0.0
        %1291 = vmatpush2.msra.mxu0 0.0
        %1292 = vmatprep.subr.mxu0 0.0
        %1293 = vmatpush2.msra.mxu0 0.0
        %1294 = vmatprep.subr.mxu0 0.0
        %1295 = vmatpush2.msra.mxu0 0.0
        %1296 = vmatprep.subr.mxu0 0.0
        %1297 = vmatpush2.msra.mxu0 0.0
        %1298 = vmatprep.subr.mxu0 0.0
        %1299 = vmatpush2.msra.mxu0 0.0
        %1300 = vmatprep.subr.mxu0 0.0
        %1301 = vmatpush2.msra.mxu0 0.0
        %1302 = vmatprep.subr.mxu0 0.0
        %1303 = vmatpush2.msra.mxu0 0.0
        %1304 = vmatprep.subr.mxu0 0.0
        %1305 = vmatpush2.msra.mxu0 0.0
        %1306 = vmatprep.subr.mxu0 0.0
        %1307 = vmatpush2.msra.mxu0 0.0
        %1308 = vmatprep.subr.mxu0 0.0
        %1309 = vmatpush2.msra.mxu0 0.0
        %1310 = vmatprep.subr.mxu0 0.0
        %1311 = vmatpush2.msra.mxu0 0.0
        %1312 = vmatprep.subr.mxu0 0.0
        %1313 = vmatpush2.msra.mxu0 0.0
        %1314 = vmatprep.subr.mxu0 0.0
        %1315 = vmatpush2.msra.mxu0 0.0
        %1316 = vmatprep.subr.mxu0 0.0
        %1317 = vmatpush2.msra.mxu0 0.0
        %1318 = vmatprep.mubr.f32.mxu0 0.0
        %1319 = vmatmul.mubr.f32.gmra.mxu0 %v736
        %v1320 = vpop.f32.mrf.mxu0
        %v1321 = vadd.f32 %v1251, %v1320
        %v1322 = vpop.f32.mrf.mxu0
        %1323 = vdwg.mxu0
        %v1324 = vld [vmem:[%s5] sm:$0x1]
        %v1326 = vlaneseq
        %v1327 = vshrl.u32 %v1326, 7
        %v1328 = vsub.s32 0, %v1327
        %v1329 = vrot.slane %v1324, %v1328
        %v1331 = vadd.f32 %v1321, %v1329
        %v1332 = vadd.f32 %v1331, %v296
        %1333 = vst [vmem:[%s295] sm:$0xff] %v1332
        %s1334 = sand.u32 %s163, 1
        %s1335 = scalar_lea.sflag [#allocation4], %s1334
        %s1336 = sand.u32 %s163, 1
        %s1337 = smul.addr %s1336, 8
        %s1338 = scalar_lea.vmem [#allocation8], %s1337
        // Predicated region
        $region57: #{tpu_custom_call.1} parent=43 // pred_check
          %p1339 = pneg %p173
        $region58: #{tpu_custom_call.1} parent=43 // pred_check_branch
          %1341 = sbr.rel (%p1339) target = $region60
        $region59: #{tpu_custom_call.1} parent=43 // pred_region
          %s1343 = ssub.s32 128, 128
          %1344 = vsyncadd %s1335, %s1343
          %s1345 = smul.addr %s24, 128
          %s1346 = scalar_lea.hbm %s6, %s1345
          %s1348 = sshll.u32 %s1338, 4
          %s1349 = int_to_ptr.vmem [resolvable:$true] %s1348
          %1351 = dma.vmem_to_hbm [thread:$0]  %s1349, 128, %s1346, %s1335
        $region60: #{tpu_custom_call.1} parent=43 // pred_fallthru
          _
      $region44: #{tpu_custom_call.1} parent=5 // pred_fallthru
        _
      %p1352 = scmp.le.s32.totalorder 2, %s19
      // Predicated region
      $region61: #{tpu_custom_call.1} parent=5 // pred_check
        %p1353 = pneg %p1352
      $region62: #{tpu_custom_call.1} parent=5 // pred_check_branch
        %1355 = sbr.rel (%p1353) target = $region64
      $region63: #{tpu_custom_call.1} parent=5 // pred_region
        %s1356 = ssub.s32 %s19, 2
        // Predicated region
        $region65: #{tpu_custom_call.1} parent=63 // pred_check
          %p1357 = pneg %p179
        $region66: #{tpu_custom_call.1} parent=63 // pred_check_branch
          %1359 = sbr.rel (%p1357) target = $region68
        $region67: #{tpu_custom_call.1} parent=63 // pred_region
          %s1360 = sand.u32 %s164, 1
          %s1361 = scalar_lea.sflag [#allocation4], %s1360
          %s1362 = sand.u32 %s164, 1
          %s1363 = smul.addr %s1362, 8
          %s1364 = scalar_lea.vmem [#allocation8], %s1363
          %1365 = dma.done %s1361, 128
        $region68: #{tpu_custom_call.1} parent=63 // pred_fallthru
          _
      $region64: #{tpu_custom_call.1} parent=5 // pred_fallthru
        _
    $region6: #{tpu_custom_call.1} parent=1 // loop_footer
      %s23 = sadd.s32 1, %s19
    $region7: #{tpu_custom_call.1} parent=1 // loop_footer_branch
      %18 = sbr.rel target = $region3
    $region8: #{tpu_custom_call.1} parent=1 // loop_exit
      _
    %1366 = vsyncpa [#allocation3], 1
    %s1367 = scalar_lea.sflag [#allocation3], 1
    %1368 = vsyncpa %s1367, 1
    %1369 = vsyncpa [#allocation6], 1
    %1370 = vsyncpa [#allocation4], 1
    %s1371 = scalar_lea.sflag [#allocation4], 1
    %1372 = vsyncpa %s1371, 1

</llo_original>
